<compile_context>
chip_gen: v7x
topology: tpu7x:2x2x1
jax: 0.10.0
libtpu: 0.0.40
codegen_flags: <defaults>
</compile_context>

<pallas_src>
import functools
import math

import jax
import jax.numpy as jnp
from jax.experimental import pallas as pl
from jax.experimental.pallas import tpu as pltpu

# ----------------------- small synthetic DeBERTa config -----------------------
VOCAB = 128
TYPE_VOCAB = 2
MAX_POS = 32
HIDDEN = 64
NUM_HEADS = 4
HEAD_DIM = HIDDEN // NUM_HEADS
INTERMEDIATE = 128
NUM_LAYERS = 2
NUM_LABELS = 3
LN_EPS = 1e-7          # DebertaV2Config.layer_norm_eps default
LOGIT_PAD = 128        # lane-dense padded logits width


# ------------------------------- kernel helpers --------------------------------
def _layernorm(x, g, b, eps):
    x = x.astype(jnp.float32)
    mu = jnp.mean(x, axis=-1, keepdims=True)
    var = jnp.mean((x - mu) * (x - mu), axis=-1, keepdims=True)
    return (x - mu) * jax.lax.rsqrt(var + eps) * g + b


def _gelu(x):
    # tanh-approx gelu (see TODO above re: exact erf-gelu).
    return jax.nn.gelu(x, approximate=True)


# -------------------------- fused whole-model kernel ---------------------------
def _model_kernel(x_ref, mcol_ref, mrow_ref, eg_ref, eb_ref,
                  wqkv_ref, bqkv_ref, wo_ref, bo_ref, g1_ref, b1_ref,
                  wi_ref, bi_ref, wo2_ref, bo2_ref, g2_ref, b2_ref,
                  pw_ref, pb_ref, cw_ref, cb_ref,
                  logits_ref, h_sc,
                  *, num_heads, head_dim, eps):
    layer = pl.program_id(1)
    n_layers = pl.num_programs(1)
    seq, hid = h_sc.shape
    scale = 1.0 / math.sqrt(head_dim)

    # ---- layer 0: DebertaV2Embeddings LayerNorm + zero padded positions -------
    @pl.when(layer == 0)
    def _():
        xn = _layernorm(x_ref[0], eg_ref[...], eb_ref[...], eps)
        h_sc[...] = xn * mcol_ref[0]

    h = h_sc[...]                                   # (S, H) f32, VMEM-resident
    hb = h.astype(jnp.bfloat16)

    # ---- fused Q|K|V projection: one (H, 3H) bf16 matmul ----------------------
    qkv = (jnp.dot(hb, wqkv_ref[layer], preferred_element_type=jnp.float32)
           + bqkv_ref[layer])                       # (S, 3H) f32

    # additive key mask computed in-kernel from the (1, S) mask row
    bias = (1.0 - mrow_ref[0]) * -1e9               # (1, S), broadcast over queries

    # ---- multi-head self-attention (per-head scores, fused output proj) -------
    ctxs = []
    for hh in range(num_heads):
        lo = hh * head_dim
        q = qkv[:, lo:lo + head_dim].astype(jnp.bfloat16)
        k = qkv[:, hid + lo:hid + lo + head_dim].astype(jnp.bfloat16)
        v = qkv[:, 2 * hid + lo:2 * hid + lo + head_dim].astype(jnp.bfloat16)
        s = jnp.einsum("qd,kd->qk", q, k,
                       preferred_element_type=jnp.float32) * scale + bias
        s = s - jnp.max(s, axis=-1, keepdims=True)
        p = jnp.exp(s)
        p = p * pl.reciprocal(jnp.sum(p, axis=-1, keepdims=True), approx=True)
        ctxs.append(jnp.dot(p.astype(jnp.bfloat16), v,
                            preferred_element_type=jnp.float32))
    ctx = jnp.concatenate(ctxs, axis=-1)            # (S, H) f32

    attn = (jnp.dot(ctx.astype(jnp.bfloat16), wo_ref[layer],
                    preferred_element_type=jnp.float32) + bo_ref[layer])
    h1 = _layernorm(attn + h, g1_ref[layer], b1_ref[layer], eps)

    # ---- FFN: dense -> gelu -> dense -> residual LayerNorm ---------------------
    inter = (jnp.dot(h1.astype(jnp.bfloat16), wi_ref[layer],
                     preferred_element_type=jnp.float32) + bi_ref[layer])
    inter = _gelu(inter)
    ffn = (jnp.dot(inter.astype(jnp.bfloat16), wo2_ref[layer],
                   preferred_element_type=jnp.float32) + bo2_ref[layer])
    h2 = _layernorm(ffn + h1, g2_ref[layer], b2_ref[layer], eps)
    h_sc[...] = h2

    # ---- last layer: ContextPooler([CLS]) + classifier (lane-padded logits) ----
    @pl.when(layer == n_layers - 1)
    def _():
        cls_tok = h2[0:1, :].astype(jnp.bfloat16)                 # (1, H)
        pooled = (jnp.dot(cls_tok, pw_ref[...],
                          preferred_element_type=jnp.float32) + pb_ref[...])
        pooled = _gelu(pooled)
        logits = (jnp.dot(pooled.astype(jnp.bfloat16), cw_ref[...],
                          preferred_element_type=jnp.float32) + cb_ref[...])
        logits_ref[0] = logits                                    # (1, LOGIT_PAD)


# ------------------------------ parameter setup --------------------------------
def init_params(key):
    keys = iter(jax.random.split(key, 32))

    def nrm(shape, std=0.02):
        return jax.random.normal(next(keys), shape, jnp.float32) * std

    L, H, I = NUM_LAYERS, HIDDEN, INTERMEDIATE
    cls_w = nrm((H, NUM_LABELS))
    cls_wp = jnp.zeros((H, LOGIT_PAD), jnp.float32).at[:, :NUM_LABELS].set(cls_w)

    return {
        "word_emb": nrm((VOCAB, H)),
        "pos_emb": nrm((MAX_POS, H)),
        "type_emb": nrm((TYPE_VOCAB, H)),
        "emb_ln_g": jnp.ones((1, H), jnp.float32),
        "emb_ln_b": jnp.zeros((1, H), jnp.float32),
        # stacked per-layer encoder weights; matmul operands stored in bf16
        "wqkv": nrm((L, H, 3 * H)).astype(jnp.bfloat16),
        "bqkv": jnp.zeros((L, 1, 3 * H), jnp.float32),
        "wo": nrm((L, H, H)).astype(jnp.bfloat16),
        "bo": jnp.zeros((L, 1, H), jnp.float32),
        "ln1_g": jnp.ones((L, 1, H), jnp.float32),
        "ln1_b": jnp.zeros((L, 1, H), jnp.float32),
        "wi": nrm((L, H, I)).astype(jnp.bfloat16),
        "bi": jnp.zeros((L, 1, I), jnp.float32),
        "wo2": nrm((L, I, H)).astype(jnp.bfloat16),
        "bo2": jnp.zeros((L, 1, H), jnp.float32),
        "ln2_g": jnp.ones((L, 1, H), jnp.float32),
        "ln2_b": jnp.zeros((L, 1, H), jnp.float32),
        "pooler_w": nrm((H, H)).astype(jnp.bfloat16),
        "pooler_b": jnp.zeros((1, H), jnp.float32),
        "cls_wp": cls_wp.astype(jnp.bfloat16),
        "cls_bp": jnp.zeros((1, LOGIT_PAD), jnp.float32),
    }


# --------------------------------- forward -------------------------------------
def model_forward(params, input_ids, attention_mask, token_type_ids):
    B, S = input_ids.shape
    H, I, L = HIDDEN, INTERMEDIATE, NUM_LAYERS
    maskf = attention_mask.astype(jnp.float32)

    # Embedding gathers stay in plain JAX glue (no clean Pallas gather here).
    positions = jnp.arange(S)
    x = (params["word_emb"][input_ids]
         + params["pos_emb"][positions][None, :, :]
         + params["type_emb"][token_type_ids])                 # (B, S, H) f32

    mask_col = maskf[..., None]                                # (B, S, 1)
    mask_row = maskf[:, None, :]                               # (B, 1, S)

    kernel = functools.partial(_model_kernel, num_heads=NUM_HEADS,
                               head_dim=HEAD_DIM, eps=LN_EPS)

    # Constant block index => whole stacked array is DMA'd once per pallas_call
    # and stays VMEM-resident for every (batch, layer) grid step.
    def resident3(shape):
        return pl.BlockSpec(shape, lambda b, l: (0, 0, 0))

    def resident2(shape):
        return pl.BlockSpec(shape, lambda b, l: (0, 0))

    in_specs = [
        pl.BlockSpec((1, S, H), lambda b, l: (b, 0, 0)),       # x_emb
        pl.BlockSpec((1, S, 1), lambda b, l: (b, 0, 0)),       # mask_col
        pl.BlockSpec((1, 1, S), lambda b, l: (b, 0, 0)),       # mask_row
        resident2((1, H)),                                     # emb_ln_g
        resident2((1, H)),                                     # emb_ln_b
        resident3((L, H, 3 * H)),                              # wqkv
        resident3((L, 1, 3 * H)),                              # bqkv
        resident3((L, H, H)),                                  # wo
        resident3((L, 1, H)),                                  # bo
        resident3((L, 1, H)),                                  # ln1_g
        resident3((L, 1, H)),                                  # ln1_b
        resident3((L, H, I)),                                  # wi
        resident3((L, 1, I)),                                  # bi
        resident3((L, I, H)),                                  # wo2
        resident3((L, 1, H)),                                  # bo2
        resident3((L, 1, H)),                                  # ln2_g
        resident3((L, 1, H)),                                  # ln2_b
        resident2((H, H)),                                     # pooler_w
        resident2((1, H)),                                     # pooler_b
        resident2((H, LOGIT_PAD)),                             # cls_w (padded)
        resident2((1, LOGIT_PAD)),                             # cls_b (padded)
    ]

    logits_padded = pl.pallas_call(
        kernel,
        out_shape=jax.ShapeDtypeStruct((B, 1, LOGIT_PAD), jnp.float32),
        grid_spec=pltpu.PrefetchScalarGridSpec(
            num_scalar_prefetch=0,
            grid=(B, NUM_LAYERS),
            in_specs=in_specs,
            out_specs=pl.BlockSpec((1, 1, LOGIT_PAD), lambda b, l: (b, 0, 0)),
            scratch_shapes=[pltpu.VMEM((S, H), jnp.float32)]),
        compiler_params=pltpu.CompilerParams(
            dimension_semantics=("parallel", "arbitrary")),
    )(x, mask_col, mask_row, params["emb_ln_g"], params["emb_ln_b"],
      params["wqkv"], params["bqkv"], params["wo"], params["bo"],
      params["ln1_g"], params["ln1_b"], params["wi"], params["bi"],
      params["wo2"], params["bo2"], params["ln2_g"], params["ln2_b"],
      params["pooler_w"], params["pooler_b"], params["cls_wp"], params["cls_bp"])

    return logits_padded[:, 0, :NUM_LABELS]        # (B, NUM_LABELS)


# ---------------------------------- main ----------------------------------------
if __name__ == "__main__":
    key = jax.random.PRNGKey(0)
    k_param, k_ids, k_type = jax.random.split(key, 3)

    B, S = 2, 16
    params = init_params(k_param)

    input_ids = jax.random.randint(k_ids, (B, S), 0, VOCAB, dtype=jnp.int32)
    token_type_ids = jax.random.randint(k_type, (B, S), 0, TYPE_VOCAB, dtype=jnp.int32)
    # Second sequence has 4 padded positions at the end.
    attention_mask = jnp.concatenate(
        [jnp.ones((1, S), jnp.int32),
         jnp.concatenate([jnp.ones((1, S - 4), jnp.int32),
                          jnp.zeros((1, 4), jnp.int32)], axis=1)], axis=0)

    logits = jax.jit(model_forward)(params, input_ids, attention_mask, token_type_ids)
    logits = jax.block_until_ready(logits)
    assert logits.shape == (B, NUM_LABELS)
    assert bool(jnp.all(jnp.isfinite(logits)))
    print("KERNEL_OK")
</pallas_src>

<mosaic_0001>
module attributes {stable_mosaic.version = 11 : i64} {
  func.func @_model_kernel(%arg0: i32, %arg1: i32, %arg2: memref<1x16x64xf32, #tpu.memory_space<vmem>>, %arg3: memref<1x16x1xf32, #tpu.memory_space<vmem>>, %arg4: memref<1x1x16xf32, #tpu.memory_space<vmem>>, %arg5: memref<1x64xf32, #tpu.memory_space<vmem>>, %arg6: memref<1x64xf32, #tpu.memory_space<vmem>>, %arg7: memref<2x64x192xbf16, #tpu.memory_space<vmem>>, %arg8: memref<2x1x192xf32, #tpu.memory_space<vmem>>, %arg9: memref<2x64x64xbf16, #tpu.memory_space<vmem>>, %arg10: memref<2x1x64xf32, #tpu.memory_space<vmem>>, %arg11: memref<2x1x64xf32, #tpu.memory_space<vmem>>, %arg12: memref<2x1x64xf32, #tpu.memory_space<vmem>>, %arg13: memref<2x64x128xbf16, #tpu.memory_space<vmem>>, %arg14: memref<2x1x128xf32, #tpu.memory_space<vmem>>, %arg15: memref<2x128x64xbf16, #tpu.memory_space<vmem>>, %arg16: memref<2x1x64xf32, #tpu.memory_space<vmem>>, %arg17: memref<2x1x64xf32, #tpu.memory_space<vmem>>, %arg18: memref<2x1x64xf32, #tpu.memory_space<vmem>>, %arg19: memref<64x64xbf16, #tpu.memory_space<vmem>>, %arg20: memref<1x64xf32, #tpu.memory_space<vmem>>, %arg21: memref<64x128xbf16, #tpu.memory_space<vmem>>, %arg22: memref<1x128xf32, #tpu.memory_space<vmem>>, %arg23: memref<1x1x128xf32, #tpu.memory_space<vmem>>, %arg24: memref<16x64xf32, #tpu.memory_space<vmem>>) attributes {dimension_semantics = [#tpu.dimension_semantics<parallel>, #tpu.dimension_semantics<arbitrary>], iteration_bounds = array<i64: 2, 2>, scalar_prefetch = 0 : i64, scratch_operands = 1 : i64, tpu.core_type = #tpu.core_type<tc>, window_params = [{transform_indices = @transform_0, window_bounds = array<i64: 1, 16, 64>}, {transform_indices = @transform_1, window_bounds = array<i64: 1, 16, 1>}, {transform_indices = @transform_2, window_bounds = array<i64: 1, 1, 16>}, {pipeline_mode = #tpu.pipeline_mode<synchronous>, transform_indices = @transform_3, window_bounds = array<i64: 1, 64>}, {pipeline_mode = #tpu.pipeline_mode<synchronous>, transform_indices = @transform_4, window_bounds = array<i64: 1, 64>}, {pipeline_mode = #tpu.pipeline_mode<synchronous>, transform_indices = @transform_5, window_bounds = array<i64: 2, 64, 192>}, {pipeline_mode = #tpu.pipeline_mode<synchronous>, transform_indices = @transform_6, window_bounds = array<i64: 2, 1, 192>}, {pipeline_mode = #tpu.pipeline_mode<synchronous>, transform_indices = @transform_7, window_bounds = array<i64: 2, 64, 64>}, {pipeline_mode = #tpu.pipeline_mode<synchronous>, transform_indices = @transform_8, window_bounds = array<i64: 2, 1, 64>}, {pipeline_mode = #tpu.pipeline_mode<synchronous>, transform_indices = @transform_9, window_bounds = array<i64: 2, 1, 64>}, {pipeline_mode = #tpu.pipeline_mode<synchronous>, transform_indices = @transform_10, window_bounds = array<i64: 2, 1, 64>}, {pipeline_mode = #tpu.pipeline_mode<synchronous>, transform_indices = @transform_11, window_bounds = array<i64: 2, 64, 128>}, {pipeline_mode = #tpu.pipeline_mode<synchronous>, transform_indices = @transform_12, window_bounds = array<i64: 2, 1, 128>}, {pipeline_mode = #tpu.pipeline_mode<synchronous>, transform_indices = @transform_13, window_bounds = array<i64: 2, 128, 64>}, {pipeline_mode = #tpu.pipeline_mode<synchronous>, transform_indices = @transform_14, window_bounds = array<i64: 2, 1, 64>}, {pipeline_mode = #tpu.pipeline_mode<synchronous>, transform_indices = @transform_15, window_bounds = array<i64: 2, 1, 64>}, {pipeline_mode = #tpu.pipeline_mode<synchronous>, transform_indices = @transform_16, window_bounds = array<i64: 2, 1, 64>}, {pipeline_mode = #tpu.pipeline_mode<synchronous>, transform_indices = @transform_17, window_bounds = array<i64: 64, 64>}, {pipeline_mode = #tpu.pipeline_mode<synchronous>, transform_indices = @transform_18, window_bounds = array<i64: 1, 64>}, {pipeline_mode = #tpu.pipeline_mode<synchronous>, transform_indices = @transform_19, window_bounds = array<i64: 64, 128>}, {pipeline_mode = #tpu.pipeline_mode<synchronous>, transform_indices = @transform_20, window_bounds = array<i64: 1, 128>}, {transform_indices = @transform_21, window_bounds = array<i64: 1, 1, 128>}]} {
    %c0_i32 = arith.constant 0 : i32
    %0 = arith.cmpi eq, %arg1, %c0_i32 : i32
    %1 = arith.extui %0 : i1 to i32
    %c0_i32_0 = arith.constant 0 : i32
    %2 = arith.cmpi ne, %1, %c0_i32_0 : i32
    scf.if %2 {
      %c0_71 = arith.constant 0 : index
      %c0_72 = arith.constant 0 : index
      %c0_73 = arith.constant 0 : index
      %222 = vector.load %arg2[%c0_71, %c0_72, %c0_73] : memref<1x16x64xf32, #tpu.memory_space<vmem>>, vector<1x16x64xf32>
      %223 = vector.shape_cast %222 : vector<1x16x64xf32> to vector<16x64xf32>
      %c0_74 = arith.constant 0 : index
      %c0_75 = arith.constant 0 : index
      %224 = vector.load %arg5[%c0_74, %c0_75] : memref<1x64xf32, #tpu.memory_space<vmem>>, vector<1x64xf32>
      %c0_76 = arith.constant 0 : index
      %c0_77 = arith.constant 0 : index
      %225 = vector.load %arg6[%c0_76, %c0_77] : memref<1x64xf32, #tpu.memory_space<vmem>>, vector<1x64xf32>
      %cst_78 = arith.constant dense<0.000000e+00> : vector<16xf32>
      %226 = vector.multi_reduction <add>, %223, %cst_78 [1] : vector<16x64xf32> to vector<16xf32>
      %227 = vector.shape_cast %226 : vector<16xf32> to vector<16x1xf32>
      %cst_79 = arith.constant 6.400000e+01 : f32
      %228 = vector.broadcast %cst_79 : f32 to vector<16x1xf32>
      %229 = arith.divf %227, %228 : vector<16x1xf32>
      %230 = vector.broadcast %229 : vector<16x1xf32> to vector<16x64xf32>
      %231 = arith.subf %223, %230 : vector<16x64xf32>
      %232 = vector.broadcast %229 : vector<16x1xf32> to vector<16x64xf32>
      %233 = arith.subf %223, %232 : vector<16x64xf32>
      %234 = arith.mulf %231, %233 : vector<16x64xf32>
      %cst_80 = arith.constant dense<0.000000e+00> : vector<16xf32>
      %235 = vector.multi_reduction <add>, %234, %cst_80 [1] : vector<16x64xf32> to vector<16xf32>
      %236 = vector.shape_cast %235 : vector<16xf32> to vector<16x1xf32>
      %cst_81 = arith.constant 6.400000e+01 : f32
      %237 = vector.broadcast %cst_81 : f32 to vector<16x1xf32>
      %238 = arith.divf %236, %237 : vector<16x1xf32>
      %239 = vector.broadcast %229 : vector<16x1xf32> to vector<16x64xf32>
      %240 = arith.subf %223, %239 : vector<16x64xf32>
      %cst_82 = arith.constant 1.000000e-07 : f32
      %241 = vector.broadcast %cst_82 : f32 to vector<16x1xf32>
      %242 = arith.addf %238, %241 : vector<16x1xf32>
      %243 = math.rsqrt %242 : vector<16x1xf32>
      %244 = vector.broadcast %243 : vector<16x1xf32> to vector<16x64xf32>
      %245 = arith.mulf %240, %244 : vector<16x64xf32>
      %246 = vector.broadcast %224 : vector<1x64xf32> to vector<16x64xf32>
      %247 = arith.mulf %245, %246 : vector<16x64xf32>
      %248 = vector.broadcast %225 : vector<1x64xf32> to vector<16x64xf32>
      %249 = arith.addf %247, %248 : vector<16x64xf32>
      %c0_83 = arith.constant 0 : index
      %c0_84 = arith.constant 0 : index
      %c0_85 = arith.constant 0 : index
      %250 = vector.load %arg3[%c0_83, %c0_84, %c0_85] : memref<1x16x1xf32, #tpu.memory_space<vmem>>, vector<1x16x1xf32>
      %251 = vector.shape_cast %250 : vector<1x16x1xf32> to vector<16x1xf32>
      %252 = vector.broadcast %251 : vector<16x1xf32> to vector<16x64xf32>
      %253 = arith.mulf %249, %252 : vector<16x64xf32>
      %c0_86 = arith.constant 0 : index
      %c0_87 = arith.constant 0 : index
      %254 = vector.load %arg24[%c0_86, %c0_87] : memref<16x64xf32, #tpu.memory_space<vmem>>, vector<16x64xf32>
      tpu.vector_store %arg24[%c0_86, %c0_87], %253 {strides = array<i32>} : memref<16x64xf32, #tpu.memory_space<vmem>>, vector<16x64xf32>,
    } else {
    }
    %c0 = arith.constant 0 : index
    %c0_1 = arith.constant 0 : index
    %3 = vector.load %arg24[%c0, %c0_1] : memref<16x64xf32, #tpu.memory_space<vmem>>, vector<16x64xf32>
    %4 = arith.truncf %3 : vector<16x64xf32> to vector<16x64xbf16>
    %5 = arith.index_cast %arg1 : i32 to index
    %c0_2 = arith.constant 0 : index
    %c0_3 = arith.constant 0 : index
    %6 = vector.load %arg7[%5, %c0_2, %c0_3] : memref<2x64x192xbf16, #tpu.memory_space<vmem>>, vector<1x64x192xbf16>
    %7 = vector.shape_cast %6 : vector<1x64x192xbf16> to vector<64x192xbf16>
    %cst = arith.constant dense<0.000000e+00> : vector<16x192xf32>
    %8 = tpu.matmul %4, %7, %cst {dimension_numbers = #tpu.dot_dimension_numbers<[1], [0], [0], [1], [0, 0, 1, 1], [], []>} : vector<16x64xbf16>, vector<64x192xbf16>, vector<16x192xf32> -> vector<16x192xf32>
    %9 = arith.index_cast %arg1 : i32 to index
    %c0_4 = arith.constant 0 : index
    %c0_5 = arith.constant 0 : index
    %10 = vector.load %arg8[%9, %c0_4, %c0_5] : memref<2x1x192xf32, #tpu.memory_space<vmem>>, vector<1x1x192xf32>
    %11 = vector.shape_cast %10 : vector<1x1x192xf32> to vector<1x192xf32>
    %12 = vector.broadcast %11 : vector<1x192xf32> to vector<16x192xf32>
    %13 = arith.addf %8, %12 : vector<16x192xf32>
    %c0_6 = arith.constant 0 : index
    %c0_7 = arith.constant 0 : index
    %c0_8 = arith.constant 0 : index
    %14 = vector.load %arg4[%c0_6, %c0_7, %c0_8] : memref<1x1x16xf32, #tpu.memory_space<vmem>>, vector<1x1x16xf32>
    %15 = vector.shape_cast %14 : vector<1x1x16xf32> to vector<1x16xf32>
    %cst_9 = arith.constant 1.000000e+00 : f32
    %16 = vector.broadcast %cst_9 : f32 to vector<1x16xf32>
    %17 = arith.subf %16, %15 : vector<1x16xf32>
    %cst_10 = arith.constant -1.000000e+09 : f32
    %18 = vector.broadcast %cst_10 : f32 to vector<1x16xf32>
    %19 = arith.mulf %17, %18 : vector<1x16xf32>
    %20 = vector.extract_strided_slice %13 {offsets = [0, 0], sizes = [16, 16], strides = [1, 1]} : vector<16x192xf32> to vector<16x16xf32>
    %21 = arith.truncf %20 : vector<16x16xf32> to vector<16x16xbf16>
    %22 = vector.extract_strided_slice %13 {offsets = [0, 64], sizes = [16, 16], strides = [1, 1]} : vector<16x192xf32> to vector<16x16xf32>
    %23 = arith.truncf %22 : vector<16x16xf32> to vector<16x16xbf16>
    %24 = vector.extract_strided_slice %13 {offsets = [0, 128], sizes = [16, 16], strides = [1, 1]} : vector<16x192xf32> to vector<16x16xf32>
    %25 = arith.truncf %24 : vector<16x16xf32> to vector<16x16xbf16>
    "tpu.trace_start"() <{level = 10 : i32, message = "qd,kd->qk"}> : () -> ()
    %cst_11 = arith.constant dense<0.000000e+00> : vector<16x16xf32>
    %26 = tpu.matmul %21, %23, %cst_11 {dimension_numbers = #tpu.dot_dimension_numbers<[1], [1], [0], [0], [0, 0, 1, 0], [], []>} : vector<16x16xbf16>, vector<16x16xbf16>, vector<16x16xf32> -> vector<16x16xf32>
    "tpu.trace_stop"() : () -> ()
    %cst_12 = arith.constant 2.500000e-01 : f32
    %27 = vector.broadcast %cst_12 : f32 to vector<16x16xf32>
    %28 = arith.mulf %26, %27 : vector<16x16xf32>
    %29 = vector.broadcast %19 : vector<1x16xf32> to vector<16x16xf32>
    %30 = arith.addf %28, %29 : vector<16x16xf32>
    %cst_13 = arith.constant dense<0xFF800000> : vector<16xf32>
    %31 = vector.multi_reduction <maximumf>, %30, %cst_13 [1] : vector<16x16xf32> to vector<16xf32>
    %32 = vector.shape_cast %31 : vector<16xf32> to vector<16x1xf32>
    %33 = vector.broadcast %32 : vector<16x1xf32> to vector<16x16xf32>
    %34 = arith.subf %30, %33 : vector<16x16xf32>
    %35 = math.exp %34 : vector<16x16xf32>
    %cst_14 = arith.constant dense<0.000000e+00> : vector<16xf32>
    %36 = vector.multi_reduction <add>, %35, %cst_14 [1] : vector<16x16xf32> to vector<16xf32>
    %37 = vector.shape_cast %36 : vector<16xf32> to vector<16x1xf32>
    %38 = tpu.reciprocal %37 {approx = true} : vector<16x1xf32> -> vector<16x1xf32>
    %39 = vector.broadcast %38 : vector<16x1xf32> to vector<16x16xf32>
    %40 = arith.mulf %35, %39 : vector<16x16xf32>
    %41 = arith.truncf %40 : vector<16x16xf32> to vector<16x16xbf16>
    %cst_15 = arith.constant dense<0.000000e+00> : vector<16x16xf32>
    %42 = tpu.matmul %41, %25, %cst_15 {dimension_numbers = #tpu.dot_dimension_numbers<[1], [0], [0], [1], [0, 0, 1, 1], [], []>} : vector<16x16xbf16>, vector<16x16xbf16>, vector<16x16xf32> -> vector<16x16xf32>
    %43 = vector.extract_strided_slice %13 {offsets = [0, 16], sizes = [16, 16], strides = [1, 1]} : vector<16x192xf32> to vector<16x16xf32>
    %44 = arith.truncf %43 : vector<16x16xf32> to vector<16x16xbf16>
    %45 = vector.extract_strided_slice %13 {offsets = [0, 80], sizes = [16, 16], strides = [1, 1]} : vector<16x192xf32> to vector<16x16xf32>
    %46 = arith.truncf %45 : vector<16x16xf32> to vector<16x16xbf16>
    %47 = vector.extract_strided_slice %13 {offsets = [0, 144], sizes = [16, 16], strides = [1, 1]} : vector<16x192xf32> to vector<16x16xf32>
    %48 = arith.truncf %47 : vector<16x16xf32> to vector<16x16xbf16>
    "tpu.trace_start"() <{level = 10 : i32, message = "qd,kd->qk"}> : () -> ()
    %cst_16 = arith.constant dense<0.000000e+00> : vector<16x16xf32>
    %49 = tpu.matmul %44, %46, %cst_16 {dimension_numbers = #tpu.dot_dimension_numbers<[1], [1], [0], [0], [0, 0, 1, 0], [], []>} : vector<16x16xbf16>, vector<16x16xbf16>, vector<16x16xf32> -> vector<16x16xf32>
    "tpu.trace_stop"() : () -> ()
    %cst_17 = arith.constant 2.500000e-01 : f32
    %50 = vector.broadcast %cst_17 : f32 to vector<16x16xf32>
    %51 = arith.mulf %49, %50 : vector<16x16xf32>
    %52 = vector.broadcast %19 : vector<1x16xf32> to vector<16x16xf32>
    %53 = arith.addf %51, %52 : vector<16x16xf32>
    %cst_18 = arith.constant dense<0xFF800000> : vector<16xf32>
    %54 = vector.multi_reduction <maximumf>, %53, %cst_18 [1] : vector<16x16xf32> to vector<16xf32>
    %55 = vector.shape_cast %54 : vector<16xf32> to vector<16x1xf32>
    %56 = vector.broadcast %55 : vector<16x1xf32> to vector<16x16xf32>
    %57 = arith.subf %53, %56 : vector<16x16xf32>
    %58 = math.exp %57 : vector<16x16xf32>
    %cst_19 = arith.constant dense<0.000000e+00> : vector<16xf32>
    %59 = vector.multi_reduction <add>, %58, %cst_19 [1] : vector<16x16xf32> to vector<16xf32>
    %60 = vector.shape_cast %59 : vector<16xf32> to vector<16x1xf32>
    %61 = tpu.reciprocal %60 {approx = true} : vector<16x1xf32> -> vector<16x1xf32>
    %62 = vector.broadcast %61 : vector<16x1xf32> to vector<16x16xf32>
    %63 = arith.mulf %58, %62 : vector<16x16xf32>
    %64 = arith.truncf %63 : vector<16x16xf32> to vector<16x16xbf16>
    %cst_20 = arith.constant dense<0.000000e+00> : vector<16x16xf32>
    %65 = tpu.matmul %64, %48, %cst_20 {dimension_numbers = #tpu.dot_dimension_numbers<[1], [0], [0], [1], [0, 0, 1, 1], [], []>} : vector<16x16xbf16>, vector<16x16xbf16>, vector<16x16xf32> -> vector<16x16xf32>
    %66 = vector.extract_strided_slice %13 {offsets = [0, 32], sizes = [16, 16], strides = [1, 1]} : vector<16x192xf32> to vector<16x16xf32>
    %67 = arith.truncf %66 : vector<16x16xf32> to vector<16x16xbf16>
    %68 = vector.extract_strided_slice %13 {offsets = [0, 96], sizes = [16, 16], strides = [1, 1]} : vector<16x192xf32> to vector<16x16xf32>
    %69 = arith.truncf %68 : vector<16x16xf32> to vector<16x16xbf16>
    %70 = vector.extract_strided_slice %13 {offsets = [0, 160], sizes = [16, 16], strides = [1, 1]} : vector<16x192xf32> to vector<16x16xf32>
    %71 = arith.truncf %70 : vector<16x16xf32> to vector<16x16xbf16>
    "tpu.trace_start"() <{level = 10 : i32, message = "qd,kd->qk"}> : () -> ()
    %cst_21 = arith.constant dense<0.000000e+00> : vector<16x16xf32>
    %72 = tpu.matmul %67, %69, %cst_21 {dimension_numbers = #tpu.dot_dimension_numbers<[1], [1], [0], [0], [0, 0, 1, 0], [], []>} : vector<16x16xbf16>, vector<16x16xbf16>, vector<16x16xf32> -> vector<16x16xf32>
    "tpu.trace_stop"() : () -> ()
    %cst_22 = arith.constant 2.500000e-01 : f32
    %73 = vector.broadcast %cst_22 : f32 to vector<16x16xf32>
    %74 = arith.mulf %72, %73 : vector<16x16xf32>
    %75 = vector.broadcast %19 : vector<1x16xf32> to vector<16x16xf32>
    %76 = arith.addf %74, %75 : vector<16x16xf32>
    %cst_23 = arith.constant dense<0xFF800000> : vector<16xf32>
    %77 = vector.multi_reduction <maximumf>, %76, %cst_23 [1] : vector<16x16xf32> to vector<16xf32>
    %78 = vector.shape_cast %77 : vector<16xf32> to vector<16x1xf32>
    %79 = vector.broadcast %78 : vector<16x1xf32> to vector<16x16xf32>
    %80 = arith.subf %76, %79 : vector<16x16xf32>
    %81 = math.exp %80 : vector<16x16xf32>
    %cst_24 = arith.constant dense<0.000000e+00> : vector<16xf32>
    %82 = vector.multi_reduction <add>, %81, %cst_24 [1] : vector<16x16xf32> to vector<16xf32>
    %83 = vector.shape_cast %82 : vector<16xf32> to vector<16x1xf32>
    %84 = tpu.reciprocal %83 {approx = true} : vector<16x1xf32> -> vector<16x1xf32>
    %85 = vector.broadcast %84 : vector<16x1xf32> to vector<16x16xf32>
    %86 = arith.mulf %81, %85 : vector<16x16xf32>
    %87 = arith.truncf %86 : vector<16x16xf32> to vector<16x16xbf16>
    %cst_25 = arith.constant dense<0.000000e+00> : vector<16x16xf32>
    %88 = tpu.matmul %87, %71, %cst_25 {dimension_numbers = #tpu.dot_dimension_numbers<[1], [0], [0], [1], [0, 0, 1, 1], [], []>} : vector<16x16xbf16>, vector<16x16xbf16>, vector<16x16xf32> -> vector<16x16xf32>
    %89 = vector.extract_strided_slice %13 {offsets = [0, 48], sizes = [16, 16], strides = [1, 1]} : vector<16x192xf32> to vector<16x16xf32>
    %90 = arith.truncf %89 : vector<16x16xf32> to vector<16x16xbf16>
    %91 = vector.extract_strided_slice %13 {offsets = [0, 112], sizes = [16, 16], strides = [1, 1]} : vector<16x192xf32> to vector<16x16xf32>
    %92 = arith.truncf %91 : vector<16x16xf32> to vector<16x16xbf16>
    %93 = vector.extract_strided_slice %13 {offsets = [0, 176], sizes = [16, 16], strides = [1, 1]} : vector<16x192xf32> to vector<16x16xf32>
    %94 = arith.truncf %93 : vector<16x16xf32> to vector<16x16xbf16>
    "tpu.trace_start"() <{level = 10 : i32, message = "qd,kd->qk"}> : () -> ()
    %cst_26 = arith.constant dense<0.000000e+00> : vector<16x16xf32>
    %95 = tpu.matmul %90, %92, %cst_26 {dimension_numbers = #tpu.dot_dimension_numbers<[1], [1], [0], [0], [0, 0, 1, 0], [], []>} : vector<16x16xbf16>, vector<16x16xbf16>, vector<16x16xf32> -> vector<16x16xf32>
    "tpu.trace_stop"() : () -> ()
    %cst_27 = arith.constant 2.500000e-01 : f32
    %96 = vector.broadcast %cst_27 : f32 to vector<16x16xf32>
    %97 = arith.mulf %95, %96 : vector<16x16xf32>
    %98 = vector.broadcast %19 : vector<1x16xf32> to vector<16x16xf32>
    %99 = arith.addf %97, %98 : vector<16x16xf32>
    %cst_28 = arith.constant dense<0xFF800000> : vector<16xf32>
    %100 = vector.multi_reduction <maximumf>, %99, %cst_28 [1] : vector<16x16xf32> to vector<16xf32>
    %101 = vector.shape_cast %100 : vector<16xf32> to vector<16x1xf32>
    %102 = vector.broadcast %101 : vector<16x1xf32> to vector<16x16xf32>
    %103 = arith.subf %99, %102 : vector<16x16xf32>
    %104 = math.exp %103 : vector<16x16xf32>
    %cst_29 = arith.constant dense<0.000000e+00> : vector<16xf32>
    %105 = vector.multi_reduction <add>, %104, %cst_29 [1] : vector<16x16xf32> to vector<16xf32>
    %106 = vector.shape_cast %105 : vector<16xf32> to vector<16x1xf32>
    %107 = tpu.reciprocal %106 {approx = true} : vector<16x1xf32> -> vector<16x1xf32>
    %108 = vector.broadcast %107 : vector<16x1xf32> to vector<16x16xf32>
    %109 = arith.mulf %104, %108 : vector<16x16xf32>
    %110 = arith.truncf %109 : vector<16x16xf32> to vector<16x16xbf16>
    %cst_30 = arith.constant dense<0.000000e+00> : vector<16x16xf32>
    %111 = tpu.matmul %110, %94, %cst_30 {dimension_numbers = #tpu.dot_dimension_numbers<[1], [0], [0], [1], [0, 0, 1, 1], [], []>} : vector<16x16xbf16>, vector<16x16xbf16>, vector<16x16xf32> -> vector<16x16xf32>
    %112 = tpu.concatenate %42, %65, %88, %111 in 1 : vector<16x16xf32>, vector<16x16xf32>, vector<16x16xf32>, vector<16x16xf32> -> vector<16x64xf32>
    %113 = arith.truncf %112 : vector<16x64xf32> to vector<16x64xbf16>
    %114 = arith.index_cast %arg1 : i32 to index
    %c0_31 = arith.constant 0 : index
    %c0_32 = arith.constant 0 : index
    %115 = vector.load %arg9[%114, %c0_31, %c0_32] : memref<2x64x64xbf16, #tpu.memory_space<vmem>>, vector<1x64x64xbf16>
    %116 = vector.shape_cast %115 : vector<1x64x64xbf16> to vector<64x64xbf16>
    %cst_33 = arith.constant dense<0.000000e+00> : vector<16x64xf32>
    %117 = tpu.matmul %113, %116, %cst_33 {dimension_numbers = #tpu.dot_dimension_numbers<[1], [0], [0], [1], [0, 0, 1, 1], [], []>} : vector<16x64xbf16>, vector<64x64xbf16>, vector<16x64xf32> -> vector<16x64xf32>
    %118 = arith.index_cast %arg1 : i32 to index
    %c0_34 = arith.constant 0 : index
    %c0_35 = arith.constant 0 : index
    %119 = vector.load %arg10[%118, %c0_34, %c0_35] : memref<2x1x64xf32, #tpu.memory_space<vmem>>, vector<1x1x64xf32>
    %120 = vector.shape_cast %119 : vector<1x1x64xf32> to vector<1x64xf32>
    %121 = vector.broadcast %120 : vector<1x64xf32> to vector<16x64xf32>
    %122 = arith.addf %117, %121 : vector<16x64xf32>
    %123 = arith.addf %122, %3 : vector<16x64xf32>
    %124 = arith.index_cast %arg1 : i32 to index
    %c0_36 = arith.constant 0 : index
    %c0_37 = arith.constant 0 : index
    %125 = vector.load %arg11[%124, %c0_36, %c0_37] : memref<2x1x64xf32, #tpu.memory_space<vmem>>, vector<1x1x64xf32>
    %126 = vector.shape_cast %125 : vector<1x1x64xf32> to vector<1x64xf32>
    %127 = arith.index_cast %arg1 : i32 to index
    %c0_38 = arith.constant 0 : index
    %c0_39 = arith.constant 0 : index
    %128 = vector.load %arg12[%127, %c0_38, %c0_39] : memref<2x1x64xf32, #tpu.memory_space<vmem>>, vector<1x1x64xf32>
    %129 = vector.shape_cast %128 : vector<1x1x64xf32> to vector<1x64xf32>
    %cst_40 = arith.constant dense<0.000000e+00> : vector<16xf32>
    %130 = vector.multi_reduction <add>, %123, %cst_40 [1] : vector<16x64xf32> to vector<16xf32>
    %131 = vector.shape_cast %130 : vector<16xf32> to vector<16x1xf32>
    %cst_41 = arith.constant 6.400000e+01 : f32
    %132 = vector.broadcast %cst_41 : f32 to vector<16x1xf32>
    %133 = arith.divf %131, %132 : vector<16x1xf32>
    %134 = vector.broadcast %133 : vector<16x1xf32> to vector<16x64xf32>
    %135 = arith.subf %123, %134 : vector<16x64xf32>
    %136 = vector.broadcast %133 : vector<16x1xf32> to vector<16x64xf32>
    %137 = arith.subf %123, %136 : vector<16x64xf32>
    %138 = arith.mulf %135, %137 : vector<16x64xf32>
    %cst_42 = arith.constant dense<0.000000e+00> : vector<16xf32>
    %139 = vector.multi_reduction <add>, %138, %cst_42 [1] : vector<16x64xf32> to vector<16xf32>
    %140 = vector.shape_cast %139 : vector<16xf32> to vector<16x1xf32>
    %cst_43 = arith.constant 6.400000e+01 : f32
    %141 = vector.broadcast %cst_43 : f32 to vector<16x1xf32>
    %142 = arith.divf %140, %141 : vector<16x1xf32>
    %143 = vector.broadcast %133 : vector<16x1xf32> to vector<16x64xf32>
    %144 = arith.subf %123, %143 : vector<16x64xf32>
    %cst_44 = arith.constant 1.000000e-07 : f32
    %145 = vector.broadcast %cst_44 : f32 to vector<16x1xf32>
    %146 = arith.addf %142, %145 : vector<16x1xf32>
    %147 = math.rsqrt %146 : vector<16x1xf32>
    %148 = vector.broadcast %147 : vector<16x1xf32> to vector<16x64xf32>
    %149 = arith.mulf %144, %148 : vector<16x64xf32>
    %150 = vector.broadcast %126 : vector<1x64xf32> to vector<16x64xf32>
    %151 = arith.mulf %149, %150 : vector<16x64xf32>
    %152 = vector.broadcast %129 : vector<1x64xf32> to vector<16x64xf32>
    %153 = arith.addf %151, %152 : vector<16x64xf32>
    %154 = arith.truncf %153 : vector<16x64xf32> to vector<16x64xbf16>
    %155 = arith.index_cast %arg1 : i32 to index
    %c0_45 = arith.constant 0 : index
    %c0_46 = arith.constant 0 : index
    %156 = vector.load %arg13[%155, %c0_45, %c0_46] : memref<2x64x128xbf16, #tpu.memory_space<vmem>>, vector<1x64x128xbf16>
    %157 = vector.shape_cast %156 : vector<1x64x128xbf16> to vector<64x128xbf16>
    %cst_47 = arith.constant dense<0.000000e+00> : vector<16x128xf32>
    %158 = tpu.matmul %154, %157, %cst_47 {dimension_numbers = #tpu.dot_dimension_numbers<[1], [0], [0], [1], [0, 0, 1, 1], [], []>} : vector<16x64xbf16>, vector<64x128xbf16>, vector<16x128xf32> -> vector<16x128xf32>
    %159 = arith.index_cast %arg1 : i32 to index
    %c0_48 = arith.constant 0 : index
    %c0_49 = arith.constant 0 : index
    %160 = vector.load %arg14[%159, %c0_48, %c0_49] : memref<2x1x128xf32, #tpu.memory_space<vmem>>, vector<1x1x128xf32>
    %161 = vector.shape_cast %160 : vector<1x1x128xf32> to vector<1x128xf32>
    %162 = vector.broadcast %161 : vector<1x128xf32> to vector<16x128xf32>
    %163 = arith.addf %158, %162 : vector<16x128xf32>
    %164 = arith.mulf %163, %163 : vector<16x128xf32>
    %165 = arith.mulf %163, %164 : vector<16x128xf32>
    %cst_50 = arith.constant 4.471500e-02 : f32
    %166 = vector.broadcast %cst_50 : f32 to vector<16x128xf32>
    %167 = arith.mulf %166, %165 : vector<16x128xf32>
    %168 = arith.addf %163, %167 : vector<16x128xf32>
    %cst_51 = arith.constant 0.797884583 : f32
    %169 = vector.broadcast %cst_51 : f32 to vector<16x128xf32>
    %170 = arith.mulf %169, %168 : vector<16x128xf32>
    %171 = math.tanh %170 : vector<16x128xf32>
    %cst_52 = arith.constant 1.000000e+00 : f32
    %172 = vector.broadcast %cst_52 : f32 to vector<16x128xf32>
    %173 = arith.addf %172, %171 : vector<16x128xf32>
    %cst_53 = arith.constant 5.000000e-01 : f32
    %174 = vector.broadcast %cst_53 : f32 to vector<16x128xf32>
    %175 = arith.mulf %174, %173 : vector<16x128xf32>
    %176 = arith.mulf %163, %175 : vector<16x128xf32>
    %177 = arith.truncf %176 : vector<16x128xf32> to vector<16x128xbf16>
    %178 = arith.index_cast %arg1 : i32 to index
    %c0_54 = arith.constant 0 : index
    %c0_55 = arith.constant 0 : index
    %179 = vector.load %arg15[%178, %c0_54, %c0_55] : memref<2x128x64xbf16, #tpu.memory_space<vmem>>, vector<1x128x64xbf16>
    %180 = vector.shape_cast %179 : vector<1x128x64xbf16> to vector<128x64xbf16>
    %cst_56 = arith.constant dense<0.000000e+00> : vector<16x64xf32>
    %181 = tpu.matmul %177, %180, %cst_56 {dimension_numbers = #tpu.dot_dimension_numbers<[1], [0], [0], [1], [0, 0, 1, 1], [], []>} : vector<16x128xbf16>, vector<128x64xbf16>, vector<16x64xf32> -> vector<16x64xf32>
    %182 = arith.index_cast %arg1 : i32 to index
    %c0_57 = arith.constant 0 : index
    %c0_58 = arith.constant 0 : index
    %183 = vector.load %arg16[%182, %c0_57, %c0_58] : memref<2x1x64xf32, #tpu.memory_space<vmem>>, vector<1x1x64xf32>
    %184 = vector.shape_cast %183 : vector<1x1x64xf32> to vector<1x64xf32>
    %185 = vector.broadcast %184 : vector<1x64xf32> to vector<16x64xf32>
    %186 = arith.addf %181, %185 : vector<16x64xf32>
    %187 = arith.addf %186, %153 : vector<16x64xf32>
    %188 = arith.index_cast %arg1 : i32 to index
    %c0_59 = arith.constant 0 : index
    %c0_60 = arith.constant 0 : index
    %189 = vector.load %arg17[%188, %c0_59, %c0_60] : memref<2x1x64xf32, #tpu.memory_space<vmem>>, vector<1x1x64xf32>
    %190 = vector.shape_cast %189 : vector<1x1x64xf32> to vector<1x64xf32>
    %191 = arith.index_cast %arg1 : i32 to index
    %c0_61 = arith.constant 0 : index
    %c0_62 = arith.constant 0 : index
    %192 = vector.load %arg18[%191, %c0_61, %c0_62] : memref<2x1x64xf32, #tpu.memory_space<vmem>>, vector<1x1x64xf32>
    %193 = vector.shape_cast %192 : vector<1x1x64xf32> to vector<1x64xf32>
    %cst_63 = arith.constant dense<0.000000e+00> : vector<16xf32>
    %194 = vector.multi_reduction <add>, %187, %cst_63 [1] : vector<16x64xf32> to vector<16xf32>
    %195 = vector.shape_cast %194 : vector<16xf32> to vector<16x1xf32>
    %cst_64 = arith.constant 6.400000e+01 : f32
    %196 = vector.broadcast %cst_64 : f32 to vector<16x1xf32>
    %197 = arith.divf %195, %196 : vector<16x1xf32>
    %198 = vector.broadcast %197 : vector<16x1xf32> to vector<16x64xf32>
    %199 = arith.subf %187, %198 : vector<16x64xf32>
    %200 = vector.broadcast %197 : vector<16x1xf32> to vector<16x64xf32>
    %201 = arith.subf %187, %200 : vector<16x64xf32>
    %202 = arith.mulf %199, %201 : vector<16x64xf32>
    %cst_65 = arith.constant dense<0.000000e+00> : vector<16xf32>
    %203 = vector.multi_reduction <add>, %202, %cst_65 [1] : vector<16x64xf32> to vector<16xf32>
    %204 = vector.shape_cast %203 : vector<16xf32> to vector<16x1xf32>
    %cst_66 = arith.constant 6.400000e+01 : f32
    %205 = vector.broadcast %cst_66 : f32 to vector<16x1xf32>
    %206 = arith.divf %204, %205 : vector<16x1xf32>
    %207 = vector.broadcast %197 : vector<16x1xf32> to vector<16x64xf32>
    %208 = arith.subf %187, %207 : vector<16x64xf32>
    %cst_67 = arith.constant 1.000000e-07 : f32
    %209 = vector.broadcast %cst_67 : f32 to vector<16x1xf32>
    %210 = arith.addf %206, %209 : vector<16x1xf32>
    %211 = math.rsqrt %210 : vector<16x1xf32>
    %212 = vector.broadcast %211 : vector<16x1xf32> to vector<16x64xf32>
    %213 = arith.mulf %208, %212 : vector<16x64xf32>
    %214 = vector.broadcast %190 : vector<1x64xf32> to vector<16x64xf32>
    %215 = arith.mulf %213, %214 : vector<16x64xf32>
    %216 = vector.broadcast %193 : vector<1x64xf32> to vector<16x64xf32>
    %217 = arith.addf %215, %216 : vector<16x64xf32>
    %c0_68 = arith.constant 0 : index
    %c0_69 = arith.constant 0 : index
    %218 = vector.load %arg24[%c0_68, %c0_69] : memref<16x64xf32, #tpu.memory_space<vmem>>, vector<16x64xf32>
    tpu.vector_store %arg24[%c0_68, %c0_69], %217 {strides = array<i32>} : memref<16x64xf32, #tpu.memory_space<vmem>>, vector<16x64xf32>,
    %c1_i32 = arith.constant 1 : i32
    %219 = arith.cmpi eq, %arg1, %c1_i32 : i32
    %220 = arith.extui %219 : i1 to i32
    %c0_i32_70 = arith.constant 0 : i32
    %221 = arith.cmpi ne, %220, %c0_i32_70 : i32
    scf.if %221 {
      %222 = vector.extract_strided_slice %217 {offsets = [0, 0], sizes = [1, 64], strides = [1, 1]} : vector<16x64xf32> to vector<1x64xf32>
      %223 = arith.truncf %222 : vector<1x64xf32> to vector<1x64xbf16>
      %c0_71 = arith.constant 0 : index
      %c0_72 = arith.constant 0 : index
      %224 = vector.load %arg19[%c0_71, %c0_72] : memref<64x64xbf16, #tpu.memory_space<vmem>>, vector<64x64xbf16>
      %cst_73 = arith.constant dense<0.000000e+00> : vector<1x64xf32>
      %225 = tpu.matmul %223, %224, %cst_73 {dimension_numbers = #tpu.dot_dimension_numbers<[1], [0], [0], [1], [0, 0, 1, 1], [], []>} : vector<1x64xbf16>, vector<64x64xbf16>, vector<1x64xf32> -> vector<1x64xf32>
      %c0_74 = arith.constant 0 : index
      %c0_75 = arith.constant 0 : index
      %226 = vector.load %arg20[%c0_74, %c0_75] : memref<1x64xf32, #tpu.memory_space<vmem>>, vector<1x64xf32>
      %227 = arith.addf %225, %226 : vector<1x64xf32>
      %228 = arith.mulf %227, %227 : vector<1x64xf32>
      %229 = arith.mulf %227, %228 : vector<1x64xf32>
      %cst_76 = arith.constant 4.471500e-02 : f32
      %230 = vector.broadcast %cst_76 : f32 to vector<1x64xf32>
      %231 = arith.mulf %230, %229 : vector<1x64xf32>
      %232 = arith.addf %227, %231 : vector<1x64xf32>
      %cst_77 = arith.constant 0.797884583 : f32
      %233 = vector.broadcast %cst_77 : f32 to vector<1x64xf32>
      %234 = arith.mulf %233, %232 : vector<1x64xf32>
      %235 = math.tanh %234 : vector<1x64xf32>
      %cst_78 = arith.constant 1.000000e+00 : f32
      %236 = vector.broadcast %cst_78 : f32 to vector<1x64xf32>
      %237 = arith.addf %236, %235 : vector<1x64xf32>
      %cst_79 = arith.constant 5.000000e-01 : f32
      %238 = vector.broadcast %cst_79 : f32 to vector<1x64xf32>
      %239 = arith.mulf %238, %237 : vector<1x64xf32>
      %240 = arith.mulf %227, %239 : vector<1x64xf32>
      %241 = arith.truncf %240 : vector<1x64xf32> to vector<1x64xbf16>
      %c0_80 = arith.constant 0 : index
      %c0_81 = arith.constant 0 : index
      %242 = vector.load %arg21[%c0_80, %c0_81] : memref<64x128xbf16, #tpu.memory_space<vmem>>, vector<64x128xbf16>
      %cst_82 = arith.constant dense<0.000000e+00> : vector<1x128xf32>
      %243 = tpu.matmul %241, %242, %cst_82 {dimension_numbers = #tpu.dot_dimension_numbers<[1], [0], [0], [1], [0, 0, 1, 1], [], []>} : vector<1x64xbf16>, vector<64x128xbf16>, vector<1x128xf32> -> vector<1x128xf32>
      %c0_83 = arith.constant 0 : index
      %c0_84 = arith.constant 0 : index
      %244 = vector.load %arg22[%c0_83, %c0_84] : memref<1x128xf32, #tpu.memory_space<vmem>>, vector<1x128xf32>
      %245 = arith.addf %243, %244 : vector<1x128xf32>
      %c0_85 = arith.constant 0 : index
      %c0_86 = arith.constant 0 : index
      %c0_87 = arith.constant 0 : index
      %246 = vector.load %arg23[%c0_85, %c0_86, %c0_87] : memref<1x1x128xf32, #tpu.memory_space<vmem>>, vector<1x1x128xf32>
      %247 = vector.shape_cast %246 : vector<1x1x128xf32> to vector<1x128xf32>
      %248 = vector.shape_cast %245 : vector<1x128xf32> to vector<1x1x128xf32>
      tpu.vector_store %arg23[%c0_85, %c0_86, %c0_87], %248 {strides = array<i32>} : memref<1x1x128xf32, #tpu.memory_space<vmem>>, vector<1x1x128xf32>,
    } else {
    }
    return
  }
  func.func @transform_0(%arg0: i32, %arg1: i32) -> (i32, i32, i32) {
    %c0_i32 = arith.constant 0 : i32
    %c0_i32_0 = arith.constant 0 : i32
    %c0_i32_1 = arith.constant 0 : i32
    return %arg0, %c0_i32, %c0_i32_0 : i32, i32, i32
  }
  func.func @transform_1(%arg0: i32, %arg1: i32) -> (i32, i32, i32) {
    %c0_i32 = arith.constant 0 : i32
    %c0_i32_0 = arith.constant 0 : i32
    %c0_i32_1 = arith.constant 0 : i32
    return %arg0, %c0_i32, %c0_i32_0 : i32, i32, i32
  }
  func.func @transform_2(%arg0: i32, %arg1: i32) -> (i32, i32, i32) {
    %c0_i32 = arith.constant 0 : i32
    %c0_i32_0 = arith.constant 0 : i32
    %c0_i32_1 = arith.constant 0 : i32
    return %arg0, %c0_i32, %c0_i32_0 : i32, i32, i32
  }
  func.func @transform_3(%arg0: i32, %arg1: i32) -> (i32, i32) {
    %c0_i32 = arith.constant 0 : i32
    %c0_i32_0 = arith.constant 0 : i32
    %c0_i32_1 = arith.constant 0 : i32
    return %c0_i32, %c0_i32_0 : i32, i32
  }
  func.func @transform_4(%arg0: i32, %arg1: i32) -> (i32, i32) {
    %c0_i32 = arith.constant 0 : i32
    %c0_i32_0 = arith.constant 0 : i32
    %c0_i32_1 = arith.constant 0 : i32
    return %c0_i32, %c0_i32_0 : i32, i32
  }
  func.func @transform_5(%arg0: i32, %arg1: i32) -> (i32, i32, i32) {
    %c0_i32 = arith.constant 0 : i32
    %c0_i32_0 = arith.constant 0 : i32
    %c0_i32_1 = arith.constant 0 : i32
    %c0_i32_2 = arith.constant 0 : i32
    return %c0_i32, %c0_i32_0, %c0_i32_1 : i32, i32, i32
  }
  func.func @transform_6(%arg0: i32, %arg1: i32) -> (i32, i32, i32) {
    %c0_i32 = arith.constant 0 : i32
    %c0_i32_0 = arith.constant 0 : i32
    %c0_i32_1 = arith.constant 0 : i32
    %c0_i32_2 = arith.constant 0 : i32
    return %c0_i32, %c0_i32_0, %c0_i32_1 : i32, i32, i32
  }
  func.func @transform_7(%arg0: i32, %arg1: i32) -> (i32, i32, i32) {
    %c0_i32 = arith.constant 0 : i32
    %c0_i32_0 = arith.constant 0 : i32
    %c0_i32_1 = arith.constant 0 : i32
    %c0_i32_2 = arith.constant 0 : i32
    return %c0_i32, %c0_i32_0, %c0_i32_1 : i32, i32, i32
  }
  func.func @transform_8(%arg0: i32, %arg1: i32) -> (i32, i32, i32) {
    %c0_i32 = arith.constant 0 : i32
    %c0_i32_0 = arith.constant 0 : i32
    %c0_i32_1 = arith.constant 0 : i32
    %c0_i32_2 = arith.constant 0 : i32
    return %c0_i32, %c0_i32_0, %c0_i32_1 : i32, i32, i32
  }
  func.func @transform_9(%arg0: i32, %arg1: i32) -> (i32, i32, i32) {
    %c0_i32 = arith.constant 0 : i32
    %c0_i32_0 = arith.constant 0 : i32
    %c0_i32_1 = arith.constant 0 : i32
    %c0_i32_2 = arith.constant 0 : i32
    return %c0_i32, %c0_i32_0, %c0_i32_1 : i32, i32, i32
  }
  func.func @transform_10(%arg0: i32, %arg1: i32) -> (i32, i32, i32) {
    %c0_i32 = arith.constant 0 : i32
    %c0_i32_0 = arith.constant 0 : i32
    %c0_i32_1 = arith.constant 0 : i32
    %c0_i32_2 = arith.constant 0 : i32
    return %c0_i32, %c0_i32_0, %c0_i32_1 : i32, i32, i32
  }
  func.func @transform_11(%arg0: i32, %arg1: i32) -> (i32, i32, i32) {
    %c0_i32 = arith.constant 0 : i32
    %c0_i32_0 = arith.constant 0 : i32
    %c0_i32_1 = arith.constant 0 : i32
    %c0_i32_2 = arith.constant 0 : i32
    return %c0_i32, %c0_i32_0, %c0_i32_1 : i32, i32, i32
  }
  func.func @transform_12(%arg0: i32, %arg1: i32) -> (i32, i32, i32) {
    %c0_i32 = arith.constant 0 : i32
    %c0_i32_0 = arith.constant 0 : i32
    %c0_i32_1 = arith.constant 0 : i32
    %c0_i32_2 = arith.constant 0 : i32
    return %c0_i32, %c0_i32_0, %c0_i32_1 : i32, i32, i32
  }
  func.func @transform_13(%arg0: i32, %arg1: i32) -> (i32, i32, i32) {
    %c0_i32 = arith.constant 0 : i32
    %c0_i32_0 = arith.constant 0 : i32
    %c0_i32_1 = arith.constant 0 : i32
    %c0_i32_2 = arith.constant 0 : i32
    return %c0_i32, %c0_i32_0, %c0_i32_1 : i32, i32, i32
  }
  func.func @transform_14(%arg0: i32, %arg1: i32) -> (i32, i32, i32) {
    %c0_i32 = arith.constant 0 : i32
    %c0_i32_0 = arith.constant 0 : i32
    %c0_i32_1 = arith.constant 0 : i32
    %c0_i32_2 = arith.constant 0 : i32
    return %c0_i32, %c0_i32_0, %c0_i32_1 : i32, i32, i32
  }
  func.func @transform_15(%arg0: i32, %arg1: i32) -> (i32, i32, i32) {
    %c0_i32 = arith.constant 0 : i32
    %c0_i32_0 = arith.constant 0 : i32
    %c0_i32_1 = arith.constant 0 : i32
    %c0_i32_2 = arith.constant 0 : i32
    return %c0_i32, %c0_i32_0, %c0_i32_1 : i32, i32, i32
  }
  func.func @transform_16(%arg0: i32, %arg1: i32) -> (i32, i32, i32) {
    %c0_i32 = arith.constant 0 : i32
    %c0_i32_0 = arith.constant 0 : i32
    %c0_i32_1 = arith.constant 0 : i32
    %c0_i32_2 = arith.constant 0 : i32
    return %c0_i32, %c0_i32_0, %c0_i32_1 : i32, i32, i32
  }
  func.func @transform_17(%arg0: i32, %arg1: i32) -> (i32, i32) {
    %c0_i32 = arith.constant 0 : i32
    %c0_i32_0 = arith.constant 0 : i32
    %c0_i32_1 = arith.constant 0 : i32
    return %c0_i32, %c0_i32_0 : i32, i32
  }
  func.func @transform_18(%arg0: i32, %arg1: i32) -> (i32, i32) {
    %c0_i32 = arith.constant 0 : i32
    %c0_i32_0 = arith.constant 0 : i32
    %c0_i32_1 = arith.constant 0 : i32
    return %c0_i32, %c0_i32_0 : i32, i32
  }
  func.func @transform_19(%arg0: i32, %arg1: i32) -> (i32, i32) {
    %c0_i32 = arith.constant 0 : i32
    %c0_i32_0 = arith.constant 0 : i32
    %c0_i32_1 = arith.constant 0 : i32
    return %c0_i32, %c0_i32_0 : i32, i32
  }
  func.func @transform_20(%arg0: i32, %arg1: i32) -> (i32, i32) {
    %c0_i32 = arith.constant 0 : i32
    %c0_i32_0 = arith.constant 0 : i32
    %c0_i32_1 = arith.constant 0 : i32
    return %c0_i32, %c0_i32_0 : i32, i32
  }
  func.func @transform_21(%arg0: i32, %arg1: i32) -> (i32, i32, i32) {
    %c0_i32 = arith.constant 0 : i32
    %c0_i32_0 = arith.constant 0 : i32
    %c0_i32_1 = arith.constant 0 : i32
    return %arg0, %c0_i32, %c0_i32_0 : i32, i32, i32
  }
}

</mosaic_0001>

<llo_original>
// kernel: model_forward.1
$region0: #{model_forward.1}
  #allocation0 [shape = 'u32[]', space=smem, size = 0x4, offset = 0x4, fixed_abs, tag = 'smem constant byte address 0x4 - core index']
  #allocation1 [shape = 'u32[144,128]{1,0:T(1,128)}', space=vmem, size = 0x12000, scoped, tag = 'internal scratch']
  #allocation2 [shape = 'f32[16,64]{1,0:T(8,128)}', space=vmem, size = 0x2000, scoped, tag = 'scratch operand']
  %s0 = inlined_call_operand.vmem [shape: f32[2,16,64], index: 0, kind: input, shape index: {}]
  %s1 = inlined_call_operand.vmem [shape: f32[2,16,1], index: 1, kind: input, shape index: {}]
  %s2 = inlined_call_operand.vmem [shape: f32[2,1,16], index: 2, kind: input, shape index: {}]
  %s3 = inlined_call_operand.vmem [shape: f32[1,64], index: 3, kind: input, shape index: {}]
  %s4 = inlined_call_operand.vmem [shape: f32[1,64], index: 4, kind: input, shape index: {}]
  %s5 = inlined_call_operand.vmem [shape: bf16[2,64,192], index: 5, kind: input, shape index: {}]
  %s6 = inlined_call_operand.vmem [shape: f32[2,1,192], index: 6, kind: input, shape index: {}]
  %s7 = inlined_call_operand.vmem [shape: bf16[2,64,64], index: 7, kind: input, shape index: {}]
  %s8 = inlined_call_operand.vmem [shape: f32[2,1,64], index: 8, kind: input, shape index: {}]
  %s9 = inlined_call_operand.vmem [shape: f32[2,1,64], index: 9, kind: input, shape index: {}]
  %s10 = inlined_call_operand.vmem [shape: f32[2,1,64], index: 10, kind: input, shape index: {}]
  %s11 = inlined_call_operand.vmem [shape: bf16[2,64,128], index: 11, kind: input, shape index: {}]
  %s12 = inlined_call_operand.vmem [shape: f32[2,1,128], index: 12, kind: input, shape index: {}]
  %s13 = inlined_call_operand.vmem [shape: bf16[2,128,64], index: 13, kind: input, shape index: {}]
  %s14 = inlined_call_operand.vmem [shape: f32[2,1,64], index: 14, kind: input, shape index: {}]
  %s15 = inlined_call_operand.vmem [shape: f32[2,1,64], index: 15, kind: input, shape index: {}]
  %s16 = inlined_call_operand.vmem [shape: f32[2,1,64], index: 16, kind: input, shape index: {}]
  %s17 = inlined_call_operand.vmem [shape: bf16[64,64], index: 17, kind: input, shape index: {}]
  %s18 = inlined_call_operand.vmem [shape: f32[1,64], index: 18, kind: input, shape index: {}]
  %s19 = inlined_call_operand.vmem [shape: bf16[64,128], index: 19, kind: input, shape index: {}]
  %s20 = inlined_call_operand.vmem [shape: f32[1,128], index: 20, kind: input, shape index: {}]
  %s21 = inlined_call_operand.hbm [shape: f32[2,1,128], index: 21, kind: output, shape index: {}]
  %s22 = sld [smem:[#allocation0]]
  $region125: #{model_forward.1} parent=0
    _
  %s24 = ssub.s32 1, %s22
  %s25 = scalar_select 0, %s24, %s22
  $region1: #{model_forward.1} parent=0
    #allocation3 [shape = 'u8[1024]{0}', space=vmem, size = 0x400, scoped, tag = 'output window, operand 0']
    #allocation4 [shape = 's32[2]{0}', space=sflag, size = 0x8, scoped, tag = 'scoped memory for model_forward.1']
    %26 = vsyncpa [#allocation4], 0
    %s27 = scalar_lea.sflag [#allocation4], 1
    %28 = vsyncpa %s27, 0
    loop: start=0, step=1, limit=6
    $region2: #{model_forward.1} parent=1 // loop_pre_header
      _
    $region3: #{model_forward.1} parent=1 // loop_header
      %s30 = sphi 0, %s34
      %p31 = scmp.ge.s32.totalorder %s30, 6
      %s37 = sphi 0, %s49
      %s38 = sphi 0, %s45
      %s39 = sphi 0, %s37
      %s40 = sphi 0, %s38
      %s41 = sphi 0, %s39
      %s42 = sphi 0, %s40
      %s52 = sphi 0, %s54
      %s55 = sphi 0, %s52
      %s56 = sphi 0, %s55
      %s72 = sphi 0, %s56
      %s78 = sphi 0, %s80
      %s81 = sphi 0, %s78
      %s82 = sphi 0, %s81
      %s98 = sphi 0, %s82
      %s104 = sphi 0, %s106
      %s107 = sphi 0, %s104
      %s108 = sphi 0, %s107
      %s124 = sphi 0, %s108
      %s128 = sphi 0, %s128
      %s130 = sphi 0, %s128
      %s131 = sphi 0, %s130
      %s145 = sphi 0, %s131
      %s149 = sphi 0, %s149
      %s151 = sphi 0, %s149
      %s152 = sphi 0, %s151
      %s166 = sphi 0, %s152
      %s170 = sphi 0, %s170
      %s172 = sphi 0, %s170
      %s173 = sphi 0, %s172
      %s187 = sphi 0, %s173
      %s191 = sphi 0, %s191
      %s193 = sphi 0, %s191
      %s194 = sphi 0, %s193
      %s208 = sphi 0, %s194
      %s212 = sphi 0, %s212
      %s214 = sphi 0, %s212
      %s215 = sphi 0, %s214
      %s229 = sphi 0, %s215
      %s233 = sphi 0, %s233
      %s235 = sphi 0, %s233
      %s236 = sphi 0, %s235
      %s250 = sphi 0, %s236
      %s254 = sphi 0, %s254
      %s256 = sphi 0, %s254
      %s257 = sphi 0, %s256
      %s271 = sphi 0, %s257
      %s275 = sphi 0, %s275
      %s277 = sphi 0, %s275
      %s278 = sphi 0, %s277
      %s292 = sphi 0, %s278
      %s296 = sphi 0, %s296
      %s298 = sphi 0, %s296
      %s299 = sphi 0, %s298
      %s313 = sphi 0, %s299
      %s317 = sphi 0, %s317
      %s319 = sphi 0, %s317
      %s320 = sphi 0, %s319
      %s334 = sphi 0, %s320
      %s338 = sphi 0, %s338
      %s340 = sphi 0, %s338
      %s341 = sphi 0, %s340
      %s355 = sphi 0, %s341
      %s359 = sphi 0, %s359
      %s361 = sphi 0, %s359
      %s362 = sphi 0, %s361
      %s376 = sphi 0, %s362
      %s380 = sphi 0, %s380
      %s382 = sphi 0, %s380
      %s383 = sphi 0, %s382
      %s397 = sphi 0, %s383
      %s401 = sphi 0, %s401
      %s403 = sphi 0, %s401
      %s404 = sphi 0, %s403
      %s418 = sphi 0, %s404
      %s422 = sphi 0, %s422
      %s424 = sphi 0, %s422
      %s425 = sphi 0, %s424
      %s439 = sphi 0, %s425
      %s443 = sphi 0, %s443
      %s445 = sphi 0, %s443
      %s446 = sphi 0, %s445
      %s460 = sphi 0, %s446
      %s464 = sphi 0, %s464
      %s466 = sphi 0, %s464
      %s467 = sphi 0, %s466
      %s481 = sphi 0, %s467
      %s485 = sphi 0, %s485
      %s487 = sphi 0, %s485
      %s488 = sphi 0, %s487
      %s502 = sphi 0, %s488
      %s508 = sphi 0, %s510
      %s511 = sphi 0, %s508
      %s512 = sphi 0, %s511
      %s528 = sphi 0, %s512
    $region4: #{model_forward.1} parent=1 // loop_header_branch
      %33 = sbr.rel (%p31) target = $region8
    $region5: #{model_forward.1} parent=1 // loop_body
      %s35 = ssub.s32 %s30, 1
      %s36 = ssub.s32 %s30, 2
      %s43 = sadd.s32 1, %s38
      %p44 = scmp.ge.s32.totalorder %s43, 2
      %s45 = scalar_select %p44, 0, %s43
      %s46 = sadd.s32 1, %s37
      %s47 = scalar_select %p44, %s46, %s37
      %p48 = scmp.ge.s32.totalorder %s47, 2
      %s49 = scalar_select %p48, 0, %s47
      %s50 = ssub.s32 %s37, %s49
      %p51 = scmp.eq.s32.totalorder %s50, 0
      %s53 = sadd.s32 %s52, 1
      %s54 = scalar_select %p51, %s52, %s53
      %p57 = pneg %p51
      %p58 = scmp.eq.s32.totalorder %s30, 3
      %p59 = por %p57, %p58
      %p60 = scmp.ne.s32.totalorder %s52, %s55
      %p61 = scmp.eq.s32.totalorder %s30, 0
      %p62 = por %p60, %p61
      %p63 = scmp.ne.s32.totalorder %s52, %s55
      %p64 = scmp.eq.s32.totalorder %s35, 3
      %p65 = por %p63, %p64
      %p66 = scmp.ne.s32.totalorder %s55, %s56
      %p67 = scmp.eq.s32.totalorder %s35, 0
      %p68 = por %p66, %p67
      %p69 = scmp.ne.s32.totalorder %s55, %s56
      %p70 = scmp.eq.s32.totalorder %s36, 3
      %p71 = por %p69, %p70
      %p73 = scmp.ne.s32.totalorder %s56, %s72
      %p74 = scmp.eq.s32.totalorder %s36, 0
      %p75 = por %p73, %p74
      %s76 = ssub.s32 %s37, %s49
      %p77 = scmp.eq.s32.totalorder %s76, 0
      %s79 = sadd.s32 %s78, 1
      %s80 = scalar_select %p77, %s78, %s79
      %p83 = pneg %p77
      %p84 = scmp.eq.s32.totalorder %s30, 3
      %p85 = por %p83, %p84
      %p86 = scmp.ne.s32.totalorder %s78, %s81
      %p87 = scmp.eq.s32.totalorder %s30, 0
      %p88 = por %p86, %p87
      %p89 = scmp.ne.s32.totalorder %s78, %s81
      %p90 = scmp.eq.s32.totalorder %s35, 3
      %p91 = por %p89, %p90
      %p92 = scmp.ne.s32.totalorder %s81, %s82
      %p93 = scmp.eq.s32.totalorder %s35, 0
      %p94 = por %p92, %p93
      %p95 = scmp.ne.s32.totalorder %s81, %s82
      %p96 = scmp.eq.s32.totalorder %s36, 3
      %p97 = por %p95, %p96
      %p99 = scmp.ne.s32.totalorder %s82, %s98
      %p100 = scmp.eq.s32.totalorder %s36, 0
      %p101 = por %p99, %p100
      %s102 = ssub.s32 %s37, %s49
      %p103 = scmp.eq.s32.totalorder %s102, 0
      %s105 = sadd.s32 %s104, 1
      %s106 = scalar_select %p103, %s104, %s105
      %p109 = pneg %p103
      %p110 = scmp.eq.s32.totalorder %s30, 3
      %p111 = por %p109, %p110
      %p112 = scmp.ne.s32.totalorder %s104, %s107
      %p113 = scmp.eq.s32.totalorder %s30, 0
      %p114 = por %p112, %p113
      %p115 = scmp.ne.s32.totalorder %s104, %s107
      %p116 = scmp.eq.s32.totalorder %s35, 3
      %p117 = por %p115, %p116
      %p118 = scmp.ne.s32.totalorder %s107, %s108
      %p119 = scmp.eq.s32.totalorder %s35, 0
      %p120 = por %p118, %p119
      %p121 = scmp.ne.s32.totalorder %s107, %s108
      %p122 = scmp.eq.s32.totalorder %s36, 3
      %p123 = por %p121, %p122
      %p125 = scmp.ne.s32.totalorder %s108, %s124
      %p126 = scmp.eq.s32.totalorder %s36, 0
      %p127 = por %p125, %p126
      %s129 = sadd.s32 %s128, 1
      %p132 = scmp.eq.s32.totalorder %s30, 3
      %p133 = scmp.ne.s32.totalorder %s128, %s130
      %p134 = scmp.eq.s32.totalorder %s30, 0
      %p135 = por %p133, %p134
      %p136 = scmp.ne.s32.totalorder %s128, %s130
      %p137 = scmp.eq.s32.totalorder %s35, 3
      %p138 = por %p136, %p137
      %p139 = scmp.ne.s32.totalorder %s130, %s131
      %p140 = scmp.eq.s32.totalorder %s35, 0
      %p141 = por %p139, %p140
      %p142 = scmp.ne.s32.totalorder %s130, %s131
      %p143 = scmp.eq.s32.totalorder %s36, 3
      %p144 = por %p142, %p143
      %p146 = scmp.ne.s32.totalorder %s131, %s145
      %p147 = scmp.eq.s32.totalorder %s36, 0
      %p148 = por %p146, %p147
      %s150 = sadd.s32 %s149, 1
      %p153 = scmp.eq.s32.totalorder %s30, 3
      %p154 = scmp.ne.s32.totalorder %s149, %s151
      %p155 = scmp.eq.s32.totalorder %s30, 0
      %p156 = por %p154, %p155
      %p157 = scmp.ne.s32.totalorder %s149, %s151
      %p158 = scmp.eq.s32.totalorder %s35, 3
      %p159 = por %p157, %p158
      %p160 = scmp.ne.s32.totalorder %s151, %s152
      %p161 = scmp.eq.s32.totalorder %s35, 0
      %p162 = por %p160, %p161
      %p163 = scmp.ne.s32.totalorder %s151, %s152
      %p164 = scmp.eq.s32.totalorder %s36, 3
      %p165 = por %p163, %p164
      %p167 = scmp.ne.s32.totalorder %s152, %s166
      %p168 = scmp.eq.s32.totalorder %s36, 0
      %p169 = por %p167, %p168
      %s171 = sadd.s32 %s170, 1
      %p174 = scmp.eq.s32.totalorder %s30, 3
      %p175 = scmp.ne.s32.totalorder %s170, %s172
      %p176 = scmp.eq.s32.totalorder %s30, 0
      %p177 = por %p175, %p176
      %p178 = scmp.ne.s32.totalorder %s170, %s172
      %p179 = scmp.eq.s32.totalorder %s35, 3
      %p180 = por %p178, %p179
      %p181 = scmp.ne.s32.totalorder %s172, %s173
      %p182 = scmp.eq.s32.totalorder %s35, 0
      %p183 = por %p181, %p182
      %p184 = scmp.ne.s32.totalorder %s172, %s173
      %p185 = scmp.eq.s32.totalorder %s36, 3
      %p186 = por %p184, %p185
      %p188 = scmp.ne.s32.totalorder %s173, %s187
      %p189 = scmp.eq.s32.totalorder %s36, 0
      %p190 = por %p188, %p189
      %s192 = sadd.s32 %s191, 1
      %p195 = scmp.eq.s32.totalorder %s30, 3
      %p196 = scmp.ne.s32.totalorder %s191, %s193
      %p197 = scmp.eq.s32.totalorder %s30, 0
      %p198 = por %p196, %p197
      %p199 = scmp.ne.s32.totalorder %s191, %s193
      %p200 = scmp.eq.s32.totalorder %s35, 3
      %p201 = por %p199, %p200
      %p202 = scmp.ne.s32.totalorder %s193, %s194
      %p203 = scmp.eq.s32.totalorder %s35, 0
      %p204 = por %p202, %p203
      %p205 = scmp.ne.s32.totalorder %s193, %s194
      %p206 = scmp.eq.s32.totalorder %s36, 3
      %p207 = por %p205, %p206
      %p209 = scmp.ne.s32.totalorder %s194, %s208
      %p210 = scmp.eq.s32.totalorder %s36, 0
      %p211 = por %p209, %p210
      %s213 = sadd.s32 %s212, 1
      %p216 = scmp.eq.s32.totalorder %s30, 3
      %p217 = scmp.ne.s32.totalorder %s212, %s214
      %p218 = scmp.eq.s32.totalorder %s30, 0
      %p219 = por %p217, %p218
      %p220 = scmp.ne.s32.totalorder %s212, %s214
      %p221 = scmp.eq.s32.totalorder %s35, 3
      %p222 = por %p220, %p221
      %p223 = scmp.ne.s32.totalorder %s214, %s215
      %p224 = scmp.eq.s32.totalorder %s35, 0
      %p225 = por %p223, %p224
      %p226 = scmp.ne.s32.totalorder %s214, %s215
      %p227 = scmp.eq.s32.totalorder %s36, 3
      %p228 = por %p226, %p227
      %p230 = scmp.ne.s32.totalorder %s215, %s229
      %p231 = scmp.eq.s32.totalorder %s36, 0
      %p232 = por %p230, %p231
      %s234 = sadd.s32 %s233, 1
      %p237 = scmp.eq.s32.totalorder %s30, 3
      %p238 = scmp.ne.s32.totalorder %s233, %s235
      %p239 = scmp.eq.s32.totalorder %s30, 0
      %p240 = por %p238, %p239
      %p241 = scmp.ne.s32.totalorder %s233, %s235
      %p242 = scmp.eq.s32.totalorder %s35, 3
      %p243 = por %p241, %p242
      %p244 = scmp.ne.s32.totalorder %s235, %s236
      %p245 = scmp.eq.s32.totalorder %s35, 0
      %p246 = por %p244, %p245
      %p247 = scmp.ne.s32.totalorder %s235, %s236
      %p248 = scmp.eq.s32.totalorder %s36, 3
      %p249 = por %p247, %p248
      %p251 = scmp.ne.s32.totalorder %s236, %s250
      %p252 = scmp.eq.s32.totalorder %s36, 0
      %p253 = por %p251, %p252
      %s255 = sadd.s32 %s254, 1
      %p258 = scmp.eq.s32.totalorder %s30, 3
      %p259 = scmp.ne.s32.totalorder %s254, %s256
      %p260 = scmp.eq.s32.totalorder %s30, 0
      %p261 = por %p259, %p260
      %p262 = scmp.ne.s32.totalorder %s254, %s256
      %p263 = scmp.eq.s32.totalorder %s35, 3
      %p264 = por %p262, %p263
      %p265 = scmp.ne.s32.totalorder %s256, %s257
      %p266 = scmp.eq.s32.totalorder %s35, 0
      %p267 = por %p265, %p266
      %p268 = scmp.ne.s32.totalorder %s256, %s257
      %p269 = scmp.eq.s32.totalorder %s36, 3
      %p270 = por %p268, %p269
      %p272 = scmp.ne.s32.totalorder %s257, %s271
      %p273 = scmp.eq.s32.totalorder %s36, 0
      %p274 = por %p272, %p273
      %s276 = sadd.s32 %s275, 1
      %p279 = scmp.eq.s32.totalorder %s30, 3
      %p280 = scmp.ne.s32.totalorder %s275, %s277
      %p281 = scmp.eq.s32.totalorder %s30, 0
      %p282 = por %p280, %p281
      %p283 = scmp.ne.s32.totalorder %s275, %s277
      %p284 = scmp.eq.s32.totalorder %s35, 3
      %p285 = por %p283, %p284
      %p286 = scmp.ne.s32.totalorder %s277, %s278
      %p287 = scmp.eq.s32.totalorder %s35, 0
      %p288 = por %p286, %p287
      %p289 = scmp.ne.s32.totalorder %s277, %s278
      %p290 = scmp.eq.s32.totalorder %s36, 3
      %p291 = por %p289, %p290
      %p293 = scmp.ne.s32.totalorder %s278, %s292
      %p294 = scmp.eq.s32.totalorder %s36, 0
      %p295 = por %p293, %p294
      %s297 = sadd.s32 %s296, 1
      %p300 = scmp.eq.s32.totalorder %s30, 3
      %p301 = scmp.ne.s32.totalorder %s296, %s298
      %p302 = scmp.eq.s32.totalorder %s30, 0
      %p303 = por %p301, %p302
      %p304 = scmp.ne.s32.totalorder %s296, %s298
      %p305 = scmp.eq.s32.totalorder %s35, 3
      %p306 = por %p304, %p305
      %p307 = scmp.ne.s32.totalorder %s298, %s299
      %p308 = scmp.eq.s32.totalorder %s35, 0
      %p309 = por %p307, %p308
      %p310 = scmp.ne.s32.totalorder %s298, %s299
      %p311 = scmp.eq.s32.totalorder %s36, 3
      %p312 = por %p310, %p311
      %p314 = scmp.ne.s32.totalorder %s299, %s313
      %p315 = scmp.eq.s32.totalorder %s36, 0
      %p316 = por %p314, %p315
      %s318 = sadd.s32 %s317, 1
      %p321 = scmp.eq.s32.totalorder %s30, 3
      %p322 = scmp.ne.s32.totalorder %s317, %s319
      %p323 = scmp.eq.s32.totalorder %s30, 0
      %p324 = por %p322, %p323
      %p325 = scmp.ne.s32.totalorder %s317, %s319
      %p326 = scmp.eq.s32.totalorder %s35, 3
      %p327 = por %p325, %p326
      %p328 = scmp.ne.s32.totalorder %s319, %s320
      %p329 = scmp.eq.s32.totalorder %s35, 0
      %p330 = por %p328, %p329
      %p331 = scmp.ne.s32.totalorder %s319, %s320
      %p332 = scmp.eq.s32.totalorder %s36, 3
      %p333 = por %p331, %p332
      %p335 = scmp.ne.s32.totalorder %s320, %s334
      %p336 = scmp.eq.s32.totalorder %s36, 0
      %p337 = por %p335, %p336
      %s339 = sadd.s32 %s338, 1
      %p342 = scmp.eq.s32.totalorder %s30, 3
      %p343 = scmp.ne.s32.totalorder %s338, %s340
      %p344 = scmp.eq.s32.totalorder %s30, 0
      %p345 = por %p343, %p344
      %p346 = scmp.ne.s32.totalorder %s338, %s340
      %p347 = scmp.eq.s32.totalorder %s35, 3
      %p348 = por %p346, %p347
      %p349 = scmp.ne.s32.totalorder %s340, %s341
      %p350 = scmp.eq.s32.totalorder %s35, 0
      %p351 = por %p349, %p350
      %p352 = scmp.ne.s32.totalorder %s340, %s341
      %p353 = scmp.eq.s32.totalorder %s36, 3
      %p354 = por %p352, %p353
      %p356 = scmp.ne.s32.totalorder %s341, %s355
      %p357 = scmp.eq.s32.totalorder %s36, 0
      %p358 = por %p356, %p357
      %s360 = sadd.s32 %s359, 1
      %p363 = scmp.eq.s32.totalorder %s30, 3
      %p364 = scmp.ne.s32.totalorder %s359, %s361
      %p365 = scmp.eq.s32.totalorder %s30, 0
      %p366 = por %p364, %p365
      %p367 = scmp.ne.s32.totalorder %s359, %s361
      %p368 = scmp.eq.s32.totalorder %s35, 3
      %p369 = por %p367, %p368
      %p370 = scmp.ne.s32.totalorder %s361, %s362
      %p371 = scmp.eq.s32.totalorder %s35, 0
      %p372 = por %p370, %p371
      %p373 = scmp.ne.s32.totalorder %s361, %s362
      %p374 = scmp.eq.s32.totalorder %s36, 3
      %p375 = por %p373, %p374
      %p377 = scmp.ne.s32.totalorder %s362, %s376
      %p378 = scmp.eq.s32.totalorder %s36, 0
      %p379 = por %p377, %p378
      %s381 = sadd.s32 %s380, 1
      %p384 = scmp.eq.s32.totalorder %s30, 3
      %p385 = scmp.ne.s32.totalorder %s380, %s382
      %p386 = scmp.eq.s32.totalorder %s30, 0
      %p387 = por %p385, %p386
      %p388 = scmp.ne.s32.totalorder %s380, %s382
      %p389 = scmp.eq.s32.totalorder %s35, 3
      %p390 = por %p388, %p389
      %p391 = scmp.ne.s32.totalorder %s382, %s383
      %p392 = scmp.eq.s32.totalorder %s35, 0
      %p393 = por %p391, %p392
      %p394 = scmp.ne.s32.totalorder %s382, %s383
      %p395 = scmp.eq.s32.totalorder %s36, 3
      %p396 = por %p394, %p395
      %p398 = scmp.ne.s32.totalorder %s383, %s397
      %p399 = scmp.eq.s32.totalorder %s36, 0
      %p400 = por %p398, %p399
      %s402 = sadd.s32 %s401, 1
      %p405 = scmp.eq.s32.totalorder %s30, 3
      %p406 = scmp.ne.s32.totalorder %s401, %s403
      %p407 = scmp.eq.s32.totalorder %s30, 0
      %p408 = por %p406, %p407
      %p409 = scmp.ne.s32.totalorder %s401, %s403
      %p410 = scmp.eq.s32.totalorder %s35, 3
      %p411 = por %p409, %p410
      %p412 = scmp.ne.s32.totalorder %s403, %s404
      %p413 = scmp.eq.s32.totalorder %s35, 0
      %p414 = por %p412, %p413
      %p415 = scmp.ne.s32.totalorder %s403, %s404
      %p416 = scmp.eq.s32.totalorder %s36, 3
      %p417 = por %p415, %p416
      %p419 = scmp.ne.s32.totalorder %s404, %s418
      %p420 = scmp.eq.s32.totalorder %s36, 0
      %p421 = por %p419, %p420
      %s423 = sadd.s32 %s422, 1
      %p426 = scmp.eq.s32.totalorder %s30, 3
      %p427 = scmp.ne.s32.totalorder %s422, %s424
      %p428 = scmp.eq.s32.totalorder %s30, 0
      %p429 = por %p427, %p428
      %p430 = scmp.ne.s32.totalorder %s422, %s424
      %p431 = scmp.eq.s32.totalorder %s35, 3
      %p432 = por %p430, %p431
      %p433 = scmp.ne.s32.totalorder %s424, %s425
      %p434 = scmp.eq.s32.totalorder %s35, 0
      %p435 = por %p433, %p434
      %p436 = scmp.ne.s32.totalorder %s424, %s425
      %p437 = scmp.eq.s32.totalorder %s36, 3
      %p438 = por %p436, %p437
      %p440 = scmp.ne.s32.totalorder %s425, %s439
      %p441 = scmp.eq.s32.totalorder %s36, 0
      %p442 = por %p440, %p441
      %s444 = sadd.s32 %s443, 1
      %p447 = scmp.eq.s32.totalorder %s30, 3
      %p448 = scmp.ne.s32.totalorder %s443, %s445
      %p449 = scmp.eq.s32.totalorder %s30, 0
      %p450 = por %p448, %p449
      %p451 = scmp.ne.s32.totalorder %s443, %s445
      %p452 = scmp.eq.s32.totalorder %s35, 3
      %p453 = por %p451, %p452
      %p454 = scmp.ne.s32.totalorder %s445, %s446
      %p455 = scmp.eq.s32.totalorder %s35, 0
      %p456 = por %p454, %p455
      %p457 = scmp.ne.s32.totalorder %s445, %s446
      %p458 = scmp.eq.s32.totalorder %s36, 3
      %p459 = por %p457, %p458
      %p461 = scmp.ne.s32.totalorder %s446, %s460
      %p462 = scmp.eq.s32.totalorder %s36, 0
      %p463 = por %p461, %p462
      %s465 = sadd.s32 %s464, 1
      %p468 = scmp.eq.s32.totalorder %s30, 3
      %p469 = scmp.ne.s32.totalorder %s464, %s466
      %p470 = scmp.eq.s32.totalorder %s30, 0
      %p471 = por %p469, %p470
      %p472 = scmp.ne.s32.totalorder %s464, %s466
      %p473 = scmp.eq.s32.totalorder %s35, 3
      %p474 = por %p472, %p473
      %p475 = scmp.ne.s32.totalorder %s466, %s467
      %p476 = scmp.eq.s32.totalorder %s35, 0
      %p477 = por %p475, %p476
      %p478 = scmp.ne.s32.totalorder %s466, %s467
      %p479 = scmp.eq.s32.totalorder %s36, 3
      %p480 = por %p478, %p479
      %p482 = scmp.ne.s32.totalorder %s467, %s481
      %p483 = scmp.eq.s32.totalorder %s36, 0
      %p484 = por %p482, %p483
      %s486 = sadd.s32 %s485, 1
      %p489 = scmp.eq.s32.totalorder %s30, 3
      %p490 = scmp.ne.s32.totalorder %s485, %s487
      %p491 = scmp.eq.s32.totalorder %s30, 0
      %p492 = por %p490, %p491
      %p493 = scmp.ne.s32.totalorder %s485, %s487
      %p494 = scmp.eq.s32.totalorder %s35, 3
      %p495 = por %p493, %p494
      %p496 = scmp.ne.s32.totalorder %s487, %s488
      %p497 = scmp.eq.s32.totalorder %s35, 0
      %p498 = por %p496, %p497
      %p499 = scmp.ne.s32.totalorder %s487, %s488
      %p500 = scmp.eq.s32.totalorder %s36, 3
      %p501 = por %p499, %p500
      %p503 = scmp.ne.s32.totalorder %s488, %s502
      %p504 = scmp.eq.s32.totalorder %s36, 0
      %p505 = por %p503, %p504
      %s506 = ssub.s32 %s37, %s49
      %p507 = scmp.eq.s32.totalorder %s506, 0
      %s509 = sadd.s32 %s508, 1
      %s510 = scalar_select %p507, %s508, %s509
      %p513 = pneg %p507
      %p514 = scmp.eq.s32.totalorder %s30, 3
      %p515 = por %p513, %p514
      %p516 = scmp.ne.s32.totalorder %s508, %s511
      %p517 = scmp.eq.s32.totalorder %s30, 0
      %p518 = por %p516, %p517
      %p519 = scmp.ne.s32.totalorder %s508, %s511
      %p520 = scmp.eq.s32.totalorder %s35, 3
      %p521 = por %p519, %p520
      %p522 = scmp.ne.s32.totalorder %s511, %s512
      %p523 = scmp.eq.s32.totalorder %s35, 0
      %p524 = por %p522, %p523
      %p525 = scmp.ne.s32.totalorder %s511, %s512
      %p526 = scmp.eq.s32.totalorder %s36, 3
      %p527 = por %p525, %p526
      %p529 = scmp.ne.s32.totalorder %s512, %s528
      %p530 = scmp.eq.s32.totalorder %s36, 0
      %p531 = por %p529, %p530
      %p532 = scmp.le.s32.totalorder 1, %s30
      %p533 = scmp.lt.s32.totalorder %s30, 5
      %p534 = pnand %p532, %p533
      %p535 = pneg %p534
      // Predicated region
      $region9: #{model_forward.1} parent=5 // pred_check
        _
      $region10: #{model_forward.1} parent=5 // pred_check_branch
        %537 = sbr.rel (%p534) target = $region12
      $region11: #{model_forward.1} parent=5 // pred_region
        %s538 = ssub.s32 %s30, 1
        // Predicated region
        $region13: #{model_forward.1} parent=11 // pred_check
          %p539 = pneg %p141
        $region14: #{model_forward.1} parent=11 // pred_check_branch
          %541 = sbr.rel (%p539) target = $region16
        $region15: #{model_forward.1} parent=11 // pred_region
          _
        $region16: #{model_forward.1} parent=11 // pred_fallthru
          _
        // Predicated region
        $region17: #{model_forward.1} parent=11 // pred_check
          %p542 = pneg %p162
        $region18: #{model_forward.1} parent=11 // pred_check_branch
          %544 = sbr.rel (%p542) target = $region20
        $region19: #{model_forward.1} parent=11 // pred_region
          _
        $region20: #{model_forward.1} parent=11 // pred_fallthru
          _
        // Predicated region
        $region21: #{model_forward.1} parent=11 // pred_check
          %p545 = pneg %p183
        $region22: #{model_forward.1} parent=11 // pred_check_branch
          %547 = sbr.rel (%p545) target = $region24
        $region23: #{model_forward.1} parent=11 // pred_region
          _
        $region24: #{model_forward.1} parent=11 // pred_fallthru
          _
        // Predicated region
        $region25: #{model_forward.1} parent=11 // pred_check
          %p548 = pneg %p204
        $region26: #{model_forward.1} parent=11 // pred_check_branch
          %550 = sbr.rel (%p548) target = $region28
        $region27: #{model_forward.1} parent=11 // pred_region
          _
        $region28: #{model_forward.1} parent=11 // pred_fallthru
          _
        // Predicated region
        $region29: #{model_forward.1} parent=11 // pred_check
          %p551 = pneg %p225
        $region30: #{model_forward.1} parent=11 // pred_check_branch
          %553 = sbr.rel (%p551) target = $region32
        $region31: #{model_forward.1} parent=11 // pred_region
          _
        $region32: #{model_forward.1} parent=11 // pred_fallthru
          _
        // Predicated region
        $region33: #{model_forward.1} parent=11 // pred_check
          %p554 = pneg %p246
        $region34: #{model_forward.1} parent=11 // pred_check_branch
          %556 = sbr.rel (%p554) target = $region36
        $region35: #{model_forward.1} parent=11 // pred_region
          _
        $region36: #{model_forward.1} parent=11 // pred_fallthru
          _
        // Predicated region
        $region37: #{model_forward.1} parent=11 // pred_check
          %p557 = pneg %p267
        $region38: #{model_forward.1} parent=11 // pred_check_branch
          %559 = sbr.rel (%p557) target = $region40
        $region39: #{model_forward.1} parent=11 // pred_region
          _
        $region40: #{model_forward.1} parent=11 // pred_fallthru
          _
        // Predicated region
        $region41: #{model_forward.1} parent=11 // pred_check
          %p560 = pneg %p288
        $region42: #{model_forward.1} parent=11 // pred_check_branch
          %562 = sbr.rel (%p560) target = $region44
        $region43: #{model_forward.1} parent=11 // pred_region
          _
        $region44: #{model_forward.1} parent=11 // pred_fallthru
          _
        // Predicated region
        $region45: #{model_forward.1} parent=11 // pred_check
          %p563 = pneg %p309
        $region46: #{model_forward.1} parent=11 // pred_check_branch
          %565 = sbr.rel (%p563) target = $region48
        $region47: #{model_forward.1} parent=11 // pred_region
          _
        $region48: #{model_forward.1} parent=11 // pred_fallthru
          _
        // Predicated region
        $region49: #{model_forward.1} parent=11 // pred_check
          %p566 = pneg %p330
        $region50: #{model_forward.1} parent=11 // pred_check_branch
          %568 = sbr.rel (%p566) target = $region52
        $region51: #{model_forward.1} parent=11 // pred_region
          _
        $region52: #{model_forward.1} parent=11 // pred_fallthru
          _
        // Predicated region
        $region53: #{model_forward.1} parent=11 // pred_check
          %p569 = pneg %p351
        $region54: #{model_forward.1} parent=11 // pred_check_branch
          %571 = sbr.rel (%p569) target = $region56
        $region55: #{model_forward.1} parent=11 // pred_region
          _
        $region56: #{model_forward.1} parent=11 // pred_fallthru
          _
        // Predicated region
        $region57: #{model_forward.1} parent=11 // pred_check
          %p572 = pneg %p372
        $region58: #{model_forward.1} parent=11 // pred_check_branch
          %574 = sbr.rel (%p572) target = $region60
        $region59: #{model_forward.1} parent=11 // pred_region
          _
        $region60: #{model_forward.1} parent=11 // pred_fallthru
          _
        // Predicated region
        $region61: #{model_forward.1} parent=11 // pred_check
          %p575 = pneg %p393
        $region62: #{model_forward.1} parent=11 // pred_check_branch
          %577 = sbr.rel (%p575) target = $region64
        $region63: #{model_forward.1} parent=11 // pred_region
          _
        $region64: #{model_forward.1} parent=11 // pred_fallthru
          _
        // Predicated region
        $region65: #{model_forward.1} parent=11 // pred_check
          %p578 = pneg %p414
        $region66: #{model_forward.1} parent=11 // pred_check_branch
          %580 = sbr.rel (%p578) target = $region68
        $region67: #{model_forward.1} parent=11 // pred_region
          _
        $region68: #{model_forward.1} parent=11 // pred_fallthru
          _
        // Predicated region
        $region69: #{model_forward.1} parent=11 // pred_check
          %p581 = pneg %p435
        $region70: #{model_forward.1} parent=11 // pred_check_branch
          %583 = sbr.rel (%p581) target = $region72
        $region71: #{model_forward.1} parent=11 // pred_region
          _
        $region72: #{model_forward.1} parent=11 // pred_fallthru
          _
        // Predicated region
        $region73: #{model_forward.1} parent=11 // pred_check
          %p584 = pneg %p456
        $region74: #{model_forward.1} parent=11 // pred_check_branch
          %586 = sbr.rel (%p584) target = $region76
        $region75: #{model_forward.1} parent=11 // pred_region
          _
        $region76: #{model_forward.1} parent=11 // pred_fallthru
          _
        // Predicated region
        $region77: #{model_forward.1} parent=11 // pred_check
          %p587 = pneg %p477
        $region78: #{model_forward.1} parent=11 // pred_check_branch
          %589 = sbr.rel (%p587) target = $region80
        $region79: #{model_forward.1} parent=11 // pred_region
          _
        $region80: #{model_forward.1} parent=11 // pred_fallthru
          _
        // Predicated region
        $region81: #{model_forward.1} parent=11 // pred_check
          %p590 = pneg %p498
        $region82: #{model_forward.1} parent=11 // pred_check_branch
          %592 = sbr.rel (%p590) target = $region84
        $region83: #{model_forward.1} parent=11 // pred_region
          _
        $region84: #{model_forward.1} parent=11 // pred_fallthru
          _
      $region12: #{model_forward.1} parent=5 // pred_fallthru
        _
      %p593 = scmp.lt.s32.totalorder %s30, 4
      // Predicated region
      $region85: #{model_forward.1} parent=5 // pred_check
        %p594 = pneg %p593
      $region86: #{model_forward.1} parent=5 // pred_check_branch
        %596 = sbr.rel (%p594) target = $region88
      $region87: #{model_forward.1} parent=5 // pred_region
        // Predicated region
        $region89: #{model_forward.1} parent=87 // pred_check
          %p597 = pneg %p62
        $region90: #{model_forward.1} parent=87 // pred_check_branch
          %599 = sbr.rel (%p597) target = $region92
        $region91: #{model_forward.1} parent=87 // pred_region
          %p600 = scmp.lt.s32.totalorder %s37, 1
          %s601 = scalar_select %p600, %s37, 1
          %s602 = smul.addr %s601, 2
          %s603 = smul.addr %s602, 8
          %s604 = scalar_lea.vmem %s0, %s603
        $region92: #{model_forward.1} parent=87 // pred_fallthru
          _
        // Predicated region
        $region93: #{model_forward.1} parent=87 // pred_check
          %p605 = pneg %p88
        $region94: #{model_forward.1} parent=87 // pred_check_branch
          %607 = sbr.rel (%p605) target = $region96
        $region95: #{model_forward.1} parent=87 // pred_region
          %p608 = scmp.lt.s32.totalorder %s37, 1
          %s609 = scalar_select %p608, %s37, 1
          %s610 = smul.addr %s609, 2
          %s611 = smul.addr %s610, 8
          %s612 = scalar_lea.vmem %s1, %s611
        $region96: #{model_forward.1} parent=87 // pred_fallthru
          _
        // Predicated region
        $region97: #{model_forward.1} parent=87 // pred_check
          %p613 = pneg %p114
        $region98: #{model_forward.1} parent=87 // pred_check_branch
          %615 = sbr.rel (%p613) target = $region100
        $region99: #{model_forward.1} parent=87 // pred_region
          %p616 = scmp.lt.s32.totalorder %s37, 1
          %s617 = scalar_select %p616, %s37, 1
          %s618 = scalar_lea.vmem %s2, %s617
        $region100: #{model_forward.1} parent=87 // pred_fallthru
          _
      $region88: #{model_forward.1} parent=5 // pred_fallthru
        _
      %p619 = scmp.le.s32.totalorder 1, %s30
      %p620 = scmp.lt.s32.totalorder %s30, 5
      %p621 = pnand %p619, %p620
      %p622 = pneg %p621
      // Predicated region
      $region101: #{model_forward.1} parent=5 // pred_check
        _
      $region102: #{model_forward.1} parent=5 // pred_check_branch
        %624 = sbr.rel (%p621) target = $region104
      $region103: #{model_forward.1} parent=5 // pred_region
        %s625 = ssub.s32 %s30, 1
        %p626 = scmp.lt.s32.totalorder %s39, 1
        %s627 = scalar_select %p626, %s39, 1
        %s628 = smul.addr %s627, 2
        %s629 = smul.addr %s628, 8
        %s630 = scalar_lea.vmem %s0, %s629
        %p631 = pneg %p68
        %p632 = pneg %p65
        %p633 = scmp.lt.s32.totalorder %s39, 1
        %s634 = scalar_select %p633, %s39, 1
        %s635 = smul.addr %s634, 2
        %s636 = smul.addr %s635, 8
        %s637 = scalar_lea.vmem %s1, %s636
        %p638 = pneg %p94
        %p639 = pneg %p91
        %p640 = scmp.lt.s32.totalorder %s39, 1
        %s641 = scalar_select %p640, %s39, 1
        %s642 = scalar_lea.vmem %s2, %s641
        %p643 = pneg %p120
        %p644 = pneg %p117
        %p645 = pneg %p141
        %p646 = pneg %p138
        %p647 = pneg %p162
        %p648 = pneg %p159
        %p649 = pneg %p183
        %p650 = pneg %p180
        %p651 = pneg %p204
        %p652 = pneg %p201
        %p653 = pneg %p225
        %p654 = pneg %p222
        %p655 = pneg %p246
        %p656 = pneg %p243
        %p657 = pneg %p267
        %p658 = pneg %p264
        %p659 = pneg %p288
        %p660 = pneg %p285
        %p661 = pneg %p309
        %p662 = pneg %p306
        %p663 = pneg %p330
        %p664 = pneg %p327
        %p665 = pneg %p351
        %p666 = pneg %p348
        %p667 = pneg %p372
        %p668 = pneg %p369
        %p669 = pneg %p393
        %p670 = pneg %p390
        %p671 = pneg %p414
        %p672 = pneg %p411
        %p673 = pneg %p435
        %p674 = pneg %p432
        %p675 = pneg %p456
        %p676 = pneg %p453
        %p677 = pneg %p477
        %p678 = pneg %p474
        %p679 = pneg %p498
        %p680 = pneg %p495
        %p681 = pneg %p524
        %p682 = pneg %p521
        %s683 = sand.u32 %s511, 1
        %s684 = scalar_lea.sflag [#allocation4], %s683
        %s685 = sand.u32 %s511, 1
        %s686 = scalar_lea.vmem [#allocation3], %s685
        %p687 = scmp.lt.s32.totalorder %s39, 1
        %s688 = scalar_select %p687, %s39, 1
        %s689 = smul.addr %s688, 2
        %s690 = smul.addr %s689, 8
        %s691 = scalar_lea.vmem %s0, %s690
        %p692 = scmp.lt.s32.totalorder %s39, 1
        %s693 = scalar_select %p692, %s39, 1
        %s694 = smul.addr %s693, 2
        %s695 = smul.addr %s694, 8
        %s696 = scalar_lea.vmem %s1, %s695
        %p697 = scmp.lt.s32.totalorder %s39, 1
        %s698 = scalar_select %p697, %s39, 1
        %s699 = scalar_lea.vmem %s2, %s698
        %p701 = scmp.eq.s32.totalorder %s40, 0
        // Predicated region
        $region105: #{model_forward.1} parent=103 // pred_check
          %p702 = pneg %p701
        $region106: #{model_forward.1} parent=103 // pred_check_branch
          %704 = sbr.rel (%p702) target = $region108
        $region107: #{model_forward.1} parent=103 // pred_region
          %v705 = vld [vmem:[%s691] sm:$0xff]
          %v706 = vld [vmem:[%s691 + $0x8] sm:$0xff]
          %v707 = vld [vmem:[%s3] sm:$0x1]
          %v708 = vld [vmem:[%s4] sm:$0x1]
          %vm709 = vcmask 523264
          %v710 = vsel %vm709, %v705, 0.0
          %711 = vadd.xlane.f32.xlu0 %v710
          %v712 = vpop.xlane.xlu0 %711
          %v713 = vsel %vm709, %v706, 0.0
          %714 = vadd.xlane.f32.xlu0 %v713
          %v715 = vpop.xlane.xlu0 %714
          %v716 = vrcp.pop 64.0
          %v717 = vmul.f32 %v712, %v716
          %v718 = vmul.f32 %v715, %v716
          %v719 = vsub.f32 %v705, %v717
          %v720 = vsub.f32 %v706, %v718
          %v721 = vmul.f32 %v719, %v719
          %v722 = vmul.f32 %v720, %v720
          %v723 = vsel %vm709, %v721, 0.0
          %724 = vadd.xlane.f32.xlu0 %v723
          %v725 = vpop.xlane.xlu0 %724
          %v726 = vsel %vm709, %v722, 0.0
          %727 = vadd.xlane.f32.xlu0 %v726
          %v728 = vpop.xlane.xlu0 %727
          %v729 = vmul.f32 %v725, %v716
          %v730 = vmul.f32 %v728, %v716
          %v731 = vadd.f32 %v729, 1e-07
          %v732 = vadd.f32 %v730, 1e-07
          %v733 = vrsqrt.pop %v731
          %v734 = vrsqrt.pop %v732
          %v735 = vmul.f32 %v719, %v733
          %v736 = vmul.f32 %v720, %v734
          %v738 = vlaneseq
          %v739 = vshrl.u32 %v738, 7
          %v740 = vsub.s32 0, %v739
          %v741 = vrot.slane %v707, %v740
          %v743 = vmul.f32 %v735, %v741
          %v744 = vmul.f32 %v736, %v741
          %v746 = vlaneseq
          %v747 = vshrl.u32 %v746, 7
          %v748 = vsub.s32 0, %v747
          %v749 = vrot.slane %v708, %v748
          %v751 = vadd.f32 %v743, %v749
          %v752 = vadd.f32 %v744, %v749
          %v753 = vld [vmem:[%s696] sm:$0xff]
          %v754 = vld [vmem:[%s696 + $0x8] sm:$0xff]
          %756 = vset.pattern.permute.xlu0 0
          %757 = vperm.xlu0 %756, %v753
          %v758 = vpop.permute.xlu0 %757
          %761 = vset.pattern.permute.xlu0 0
          %762 = vperm.xlu0 %761, %v754
          %v763 = vpop.permute.xlu0 %762
          %v765 = vmul.f32 %v751, %v758
          %v766 = vmul.f32 %v752, %v763
          %767 = vst.msk [vmem:[#allocation2] sm:$0xff] %vm709, %v765
          %768 = vst.msk [vmem:[#allocation2 + $0x8] sm:$0xff] %vm709, %v766
        $region108: #{model_forward.1} parent=103 // pred_fallthru
          _
        %v769 = vld [vmem:[#allocation2] sm:$0xff]
        %v770 = vld [vmem:[#allocation2 + $0x8] sm:$0xff]
        %v771 = vpack.c.bf16 %v770, %v769
        %s772 = smul.u32 %s40, 16
        %s773 = smul.addr %s772, 4
        %s774 = scalar_lea.vmem %s5, %s773
        %v775 = vld [vmem:[%s774] sm:$0xff]
        %v776 = vld [vmem:[%s774 + $0x8] sm:$0xff]
        %v777 = vld [vmem:[%s774 + $0x10] sm:$0xff]
        %v778 = vld [vmem:[%s774 + $0x18] sm:$0xff]
        %v779 = vld [vmem:[%s774 + $0x20] sm:$0xff]
        %v780 = vld [vmem:[%s774 + $0x28] sm:$0xff]
        %v781 = vld [vmem:[%s774 + $0x30] sm:$0xff]
        %v782 = vld [vmem:[%s774 + $0x38] sm:$0xff]
        %s783 = smul.u32 %s40, 2
        %s784 = scalar_lea.vmem %s6, %s783
        %v785 = vld [vmem:[%s784] sm:$0x3]
        %v787 = vlaneseq
        %v788 = vshrl.u32 %v787, 7
        %v789 = vsub.s32 0, %v788
        %v790 = vrot.slane %v785, %v789
        %v791 = vlaneseq
        %v792 = vshrl.u32 %v791, 7
        %v793 = vsub.s32 1, %v792
        %v794 = vrot.slane %v785, %v793
        %v805 = vunpack.c.l.b16 %v775
        %v806 = vunpack.c.h.b16 %v775
        %v807 = vunpack.c.l.b16 %v776
        %v808 = vunpack.c.h.b16 %v776
        %v809 = vunpack.c.l.b16 %v777
        %v810 = vunpack.c.h.b16 %v777
        %v811 = vunpack.c.l.b16 %v778
        %v812 = vunpack.c.h.b16 %v778
        %v813 = vunpack.c.l.b16 %v779
        %v814 = vunpack.c.h.b16 %v779
        %v815 = vunpack.c.l.b16 %v780
        %v816 = vunpack.c.h.b16 %v780
        %v817 = vunpack.c.l.b16 %v781
        %v818 = vunpack.c.h.b16 %v781
        %v819 = vunpack.c.l.b16 %v782
        %v820 = vunpack.c.h.b16 %v782
        %v821 = vpack.c.b16 %v807, %v805
        %v822 = vpack.c.b16 %v808, %v806
        %v823 = vpack.c.b16 %v811, %v809
        %v824 = vpack.c.b16 %v812, %v810
        %v825 = vpack.c.b16 %v815, %v813
        %v826 = vpack.c.b16 %v816, %v814
        %v827 = vpack.c.b16 %v819, %v817
        %v828 = vpack.c.b16 %v820, %v818
        %vm837 = vcmask 523264
        %v839 = vsel %vm837, %v771, 0
        %841 = vmatprep.subr.bf16.mxu0 %v822
        %842 = vmatpush1.bf16.msra.mxu0 %v821
        %843 = vmatprep.subr.bf16.mxu0 %v824
        %844 = vmatpush1.bf16.msra.mxu0 %v823
        %845 = vmatprep.subr.bf16.mxu0 %v826
        %846 = vmatpush1.bf16.msra.mxu0 %v825
        %847 = vmatprep.subr.bf16.mxu0 %v828
        %848 = vmatpush1.bf16.msra.mxu0 %v827
        %849 = vmatprep.subr.bf16.mxu0 0
        %850 = vmatpush1.bf16.msra.mxu0 0
        %851 = vmatprep.subr.bf16.mxu0 0
        %852 = vmatpush1.bf16.msra.mxu0 0
        %853 = vmatprep.subr.bf16.mxu0 0
        %854 = vmatpush1.bf16.msra.mxu0 0
        %855 = vmatprep.subr.bf16.mxu0 0
        %856 = vmatpush1.bf16.msra.mxu0 0
        %857 = vmatprep.subr.bf16.mxu0 0
        %858 = vmatpush1.bf16.msra.mxu0 0
        %859 = vmatprep.subr.bf16.mxu0 0
        %860 = vmatpush1.bf16.msra.mxu0 0
        %861 = vmatprep.subr.bf16.mxu0 0
        %862 = vmatpush1.bf16.msra.mxu0 0
        %863 = vmatprep.subr.bf16.mxu0 0
        %864 = vmatpush1.bf16.msra.mxu0 0
        %865 = vmatprep.subr.bf16.mxu0 0
        %866 = vmatpush1.bf16.msra.mxu0 0
        %867 = vmatprep.subr.bf16.mxu0 0
        %868 = vmatpush1.bf16.msra.mxu0 0
        %869 = vmatprep.subr.bf16.mxu0 0
        %870 = vmatpush1.bf16.msra.mxu0 0
        %871 = vmatprep.subr.bf16.mxu0 0
        %872 = vmatpush1.bf16.msra.mxu0 0
        %873 = vmatprep.mubr.bf16.mxu0 0
        %874 = vmatmul.mubr.bf16.gmra.mrb[0].mxu0 %v839
        %v875 = vpop.f32.mrb[0].mxu0
        %v876 = vadd.f32 %v790, %v875
        %v877 = vpop.f32.mrb[0].mxu0
        %v878 = vadd.f32 %v794, %v877
        %v879 = vpop.f32.mrb[0].mxu0
        %v880 = vadd.f32 %v790, %v879
        %v881 = vpop.f32.mrb[0].mxu0
        %v882 = vadd.f32 %v794, %v881
        %883 = vdwg.mxu0
        %v884 = vld [vmem:[%s699] sm:$0x1]
        %v885 = vsub.f32 1.0, %v884
        %v886 = vmul.f32 %v885, -1e+09
        %v887 = vpack.c.bf16 %v880, %v876
        %v888 = vpack.c.bf16 %v882, %v878
        %890 = vrot.lane.b32.xlu0 %v887, 64
        %v891 = vpop.permute.xlu0 %890
        %vm892 = vcmask 130048
        %v894 = vsel %vm892, %v887, 0
        %v897 = vsel %vm892, %v891, 0
        %899 = vmatprep.subr.bf16.mxu0 0
        %900 = vmatpush1.bf16.xpose.msra.mxu0 %v897
        %901 = vmatprep.subr.bf16.mxu0 0
        %902 = vmatpush1.bf16.xpose.msra.mxu0 0
        %903 = vmatprep.subr.bf16.mxu0 0
        %904 = vmatpush1.bf16.xpose.msra.mxu0 0
        %905 = vmatprep.subr.bf16.mxu0 0
        %906 = vmatpush1.bf16.xpose.msra.mxu0 0
        %907 = vmatprep.subr.bf16.mxu0 0
        %908 = vmatpush1.bf16.xpose.msra.mxu0 0
        %909 = vmatprep.subr.bf16.mxu0 0
        %910 = vmatpush1.bf16.xpose.msra.mxu0 0
        %911 = vmatprep.subr.bf16.mxu0 0
        %912 = vmatpush1.bf16.xpose.msra.mxu0 0
        %913 = vmatprep.subr.bf16.mxu0 0
        %914 = vmatpush1.bf16.xpose.msra.mxu0 0
        %915 = vmatprep.subr.bf16.mxu0 0
        %916 = vmatpush1.bf16.xpose.msra.mxu0 0
        %917 = vmatprep.subr.bf16.mxu0 0
        %918 = vmatpush1.bf16.xpose.msra.mxu0 0
        %919 = vmatprep.subr.bf16.mxu0 0
        %920 = vmatpush1.bf16.xpose.msra.mxu0 0
        %921 = vmatprep.subr.bf16.mxu0 0
        %922 = vmatpush1.bf16.xpose.msra.mxu0 0
        %923 = vmatprep.subr.bf16.mxu0 0
        %924 = vmatpush1.bf16.xpose.msra.mxu0 0
        %925 = vmatprep.subr.bf16.mxu0 0
        %926 = vmatpush1.bf16.xpose.msra.mxu0 0
        %927 = vmatprep.subr.bf16.mxu0 0
        %928 = vmatpush1.bf16.xpose.msra.mxu0 0
        %929 = vmatprep.subr.bf16.mxu0 0
        %930 = vmatpush1.bf16.xpose.msra.mxu0 0
        %931 = vmatprep.mubr.bf16.mxu0 0
        %932 = vmatmul.mubr.bf16.gmra.mrb[0].mxu0 %v894
        %v933 = vpop.f32.mrb[0].mxu0
        %v934 = vadd.f32 0.0, %v933
        %v935 = vpop.f32.mrb[0].mxu0
        %v936 = vpop.f32.mrb[0].mxu0
        %v937 = vadd.f32 0.0, %v936
        %v938 = vpop.f32.mrb[0].mxu0
        %939 = vdwg.mxu0
        %v940 = vmul.f32 %v934, 0.25
        %v941 = vmul.f32 %v937, 0.25
        %v943 = vlaneseq
        %v944 = vshrl.u32 %v943, 7
        %v945 = vsub.s32 0, %v944
        %v946 = vrot.slane %v886, %v945
        %v948 = vadd.f32 %v940, %v946
        %v949 = vadd.f32 %v941, %v946
        %v950 = vsel %vm892, %v948, -inf
        %951 = vmax.xlane.f32.xlu0 %v950
        %v952 = vpop.xlane.xlu0 %951
        %v953 = vsel %vm892, %v949, -inf
        %954 = vmax.xlane.f32.xlu0 %v953
        %v955 = vpop.xlane.xlu0 %954
        %v956 = vsub.f32 %v948, %v952
        %v957 = vsub.f32 %v949, %v955
        %v958 = vmul.f32 %v956, 1.442695
        %v959 = vpow.pop %v958
        %v960 = vmul.f32 %v957, 1.442695
        %v961 = vpow.pop %v960
        %v962 = vsel %vm892, %v959, 0.0
        %963 = vadd.xlane.f32.xlu0 %v962
        %v964 = vpop.xlane.xlu0 %963
        %v965 = vsel %vm892, %v961, 0.0
        %966 = vadd.xlane.f32.xlu0 %v965
        %v967 = vpop.xlane.xlu0 %966
        %v968 = vrcp.pop %v964
        %v969 = vrcp.pop %v967
        %v970 = vmul.f32 %v959, %v968
        %v971 = vmul.f32 %v961, %v969
        %v972 = vpack.c.bf16 %v971, %v970
        %v974 = vsel %vm892, %v972, 0
        %976 = vmatprep.subr.bf16.mxu0 0
        %977 = vmatpush1.bf16.msra.mxu0 %v888
        %978 = vmatprep.subr.bf16.mxu0 0
        %979 = vmatpush1.bf16.msra.mxu0 0
        %980 = vmatprep.subr.bf16.mxu0 0
        %981 = vmatpush1.bf16.msra.mxu0 0
        %982 = vmatprep.subr.bf16.mxu0 0
        %983 = vmatpush1.bf16.msra.mxu0 0
        %984 = vmatprep.subr.bf16.mxu0 0
        %985 = vmatpush1.bf16.msra.mxu0 0
        %986 = vmatprep.subr.bf16.mxu0 0
        %987 = vmatpush1.bf16.msra.mxu0 0
        %988 = vmatprep.subr.bf16.mxu0 0
        %989 = vmatpush1.bf16.msra.mxu0 0
        %990 = vmatprep.subr.bf16.mxu0 0
        %991 = vmatpush1.bf16.msra.mxu0 0
        %992 = vmatprep.subr.bf16.mxu0 0
        %993 = vmatpush1.bf16.msra.mxu0 0
        %994 = vmatprep.subr.bf16.mxu0 0
        %995 = vmatpush1.bf16.msra.mxu0 0
        %996 = vmatprep.subr.bf16.mxu0 0
        %997 = vmatpush1.bf16.msra.mxu0 0
        %998 = vmatprep.subr.bf16.mxu0 0
        %999 = vmatpush1.bf16.msra.mxu0 0
        %1000 = vmatprep.subr.bf16.mxu0 0
        %1001 = vmatpush1.bf16.msra.mxu0 0
        %1002 = vmatprep.subr.bf16.mxu0 0
        %1003 = vmatpush1.bf16.msra.mxu0 0
        %1004 = vmatprep.subr.bf16.mxu0 0
        %1005 = vmatpush1.bf16.msra.mxu0 0
        %1006 = vmatprep.subr.bf16.mxu0 0
        %1007 = vmatpush1.bf16.msra.mxu0 0
        %1008 = vmatprep.mubr.bf16.mxu0 0
        %1009 = vmatmul.mubr.bf16.gmra.mrb[0].mxu0 %v974
        %v1010 = vpop.f32.mrb[0].mxu0
        %v1011 = vadd.f32 0.0, %v1010
        %v1012 = vpop.f32.mrb[0].mxu0
        %v1013 = vpop.f32.mrb[0].mxu0
        %v1014 = vadd.f32 0.0, %v1013
        %v1015 = vpop.f32.mrb[0].mxu0
        %1016 = vdwg.mxu0
        %1017 = vrot.lane.b32.xlu0 %v887, 112
        %v1018 = vpop.permute.xlu0 %1017
        %1019 = vrot.lane.b32.xlu0 %v887, 48
        %v1020 = vpop.permute.xlu0 %1019
        %v1022 = vsel %vm892, %v1018, 0
        %v1025 = vsel %vm892, %v1020, 0
        %1027 = vmatprep.subr.bf16.mxu0 0
        %1028 = vmatpush1.bf16.xpose.msra.mxu0 %v1025
        %1029 = vmatprep.subr.bf16.mxu0 0
        %1030 = vmatpush1.bf16.xpose.msra.mxu0 0
        %1031 = vmatprep.subr.bf16.mxu0 0
        %1032 = vmatpush1.bf16.xpose.msra.mxu0 0
        %1033 = vmatprep.subr.bf16.mxu0 0
        %1034 = vmatpush1.bf16.xpose.msra.mxu0 0
        %1035 = vmatprep.subr.bf16.mxu0 0
        %1036 = vmatpush1.bf16.xpose.msra.mxu0 0
        %1037 = vmatprep.subr.bf16.mxu0 0
        %1038 = vmatpush1.bf16.xpose.msra.mxu0 0
        %1039 = vmatprep.subr.bf16.mxu0 0
        %1040 = vmatpush1.bf16.xpose.msra.mxu0 0
        %1041 = vmatprep.subr.bf16.mxu0 0
        %1042 = vmatpush1.bf16.xpose.msra.mxu0 0
        %1043 = vmatprep.subr.bf16.mxu0 0
        %1044 = vmatpush1.bf16.xpose.msra.mxu0 0
        %1045 = vmatprep.subr.bf16.mxu0 0
        %1046 = vmatpush1.bf16.xpose.msra.mxu0 0
        %1047 = vmatprep.subr.bf16.mxu0 0
        %1048 = vmatpush1.bf16.xpose.msra.mxu0 0
        %1049 = vmatprep.subr.bf16.mxu0 0
        %1050 = vmatpush1.bf16.xpose.msra.mxu0 0
        %1051 = vmatprep.subr.bf16.mxu0 0
        %1052 = vmatpush1.bf16.xpose.msra.mxu0 0
        %1053 = vmatprep.subr.bf16.mxu0 0
        %1054 = vmatpush1.bf16.xpose.msra.mxu0 0
        %1055 = vmatprep.subr.bf16.mxu0 0
        %1056 = vmatpush1.bf16.xpose.msra.mxu0 0
        %1057 = vmatprep.subr.bf16.mxu0 0
        %1058 = vmatpush1.bf16.xpose.msra.mxu0 0
        %1059 = vmatprep.mubr.bf16.mxu0 0
        %1060 = vmatmul.mubr.bf16.gmra.mrb[0].mxu0 %v1022
        %v1061 = vpop.f32.mrb[0].mxu0
        %v1062 = vadd.f32 0.0, %v1061
        %v1063 = vpop.f32.mrb[0].mxu0
        %v1064 = vpop.f32.mrb[0].mxu0
        %v1065 = vadd.f32 0.0, %v1064
        %v1066 = vpop.f32.mrb[0].mxu0
        %1067 = vdwg.mxu0
        %v1068 = vmul.f32 %v1062, 0.25
        %v1069 = vmul.f32 %v1065, 0.25
        %v1070 = vadd.f32 %v1068, %v946
        %v1071 = vadd.f32 %v1069, %v946
        %v1072 = vsel %vm892, %v1070, -inf
        %1073 = vmax.xlane.f32.xlu0 %v1072
        %v1074 = vpop.xlane.xlu0 %1073
        %v1075 = vsel %vm892, %v1071, -inf
        %1076 = vmax.xlane.f32.xlu0 %v1075
        %v1077 = vpop.xlane.xlu0 %1076
        %v1078 = vsub.f32 %v1070, %v1074
        %v1079 = vsub.f32 %v1071, %v1077
        %v1080 = vmul.f32 %v1078, 1.442695
        %v1081 = vpow.pop %v1080
        %v1082 = vmul.f32 %v1079, 1.442695
        %v1083 = vpow.pop %v1082
        %v1084 = vsel %vm892, %v1081, 0.0
        %1085 = vadd.xlane.f32.xlu0 %v1084
        %v1086 = vpop.xlane.xlu0 %1085
        %v1087 = vsel %vm892, %v1083, 0.0
        %1088 = vadd.xlane.f32.xlu0 %v1087
        %v1089 = vpop.xlane.xlu0 %1088
        %v1090 = vrcp.pop %v1086
        %v1091 = vrcp.pop %v1089
        %v1092 = vmul.f32 %v1081, %v1090
        %v1093 = vmul.f32 %v1083, %v1091
        %v1094 = vpack.c.bf16 %v1093, %v1092
        %1096 = vrot.lane.b32.xlu0 %v888, 112
        %v1097 = vpop.permute.xlu0 %1096
        %v1100 = vsel %vm892, %v1094, 0
        %1102 = vmatprep.subr.bf16.mxu0 0
        %1103 = vmatpush1.bf16.msra.mxu0 %v1097
        %1104 = vmatprep.subr.bf16.mxu0 0
        %1105 = vmatpush1.bf16.msra.mxu0 0
        %1106 = vmatprep.subr.bf16.mxu0 0
        %1107 = vmatpush1.bf16.msra.mxu0 0
        %1108 = vmatprep.subr.bf16.mxu0 0
        %1109 = vmatpush1.bf16.msra.mxu0 0
        %1110 = vmatprep.subr.bf16.mxu0 0
        %1111 = vmatpush1.bf16.msra.mxu0 0
        %1112 = vmatprep.subr.bf16.mxu0 0
        %1113 = vmatpush1.bf16.msra.mxu0 0
        %1114 = vmatprep.subr.bf16.mxu0 0
        %1115 = vmatpush1.bf16.msra.mxu0 0
        %1116 = vmatprep.subr.bf16.mxu0 0
        %1117 = vmatpush1.bf16.msra.mxu0 0
        %1118 = vmatprep.subr.bf16.mxu0 0
        %1119 = vmatpush1.bf16.msra.mxu0 0
        %1120 = vmatprep.subr.bf16.mxu0 0
        %1121 = vmatpush1.bf16.msra.mxu0 0
        %1122 = vmatprep.subr.bf16.mxu0 0
        %1123 = vmatpush1.bf16.msra.mxu0 0
        %1124 = vmatprep.subr.bf16.mxu0 0
        %1125 = vmatpush1.bf16.msra.mxu0 0
        %1126 = vmatprep.subr.bf16.mxu0 0
        %1127 = vmatpush1.bf16.msra.mxu0 0
        %1128 = vmatprep.subr.bf16.mxu0 0
        %1129 = vmatpush1.bf16.msra.mxu0 0
        %1130 = vmatprep.subr.bf16.mxu0 0
        %1131 = vmatpush1.bf16.msra.mxu0 0
        %1132 = vmatprep.subr.bf16.mxu0 0
        %1133 = vmatpush1.bf16.msra.mxu0 0
        %1134 = vmatprep.mubr.bf16.mxu0 0
        %1135 = vmatmul.mubr.bf16.gmra.mrb[0].mxu0 %v1100
        %v1136 = vpop.f32.mrb[0].mxu0
        %v1137 = vadd.f32 0.0, %v1136
        %v1138 = vpop.f32.mrb[0].mxu0
        %v1139 = vpop.f32.mrb[0].mxu0
        %v1140 = vadd.f32 0.0, %v1139
        %v1141 = vpop.f32.mrb[0].mxu0
        %1142 = vdwg.mxu0
        %1143 = vrot.lane.b32.xlu0 %v887, 96
        %v1144 = vpop.permute.xlu0 %1143
        %1145 = vrot.lane.b32.xlu0 %v887, 32
        %v1146 = vpop.permute.xlu0 %1145
        %v1148 = vsel %vm892, %v1144, 0
        %v1151 = vsel %vm892, %v1146, 0
        %1153 = vmatprep.subr.bf16.mxu0 0
        %1154 = vmatpush1.bf16.xpose.msra.mxu0 %v1151
        %1155 = vmatprep.subr.bf16.mxu0 0
        %1156 = vmatpush1.bf16.xpose.msra.mxu0 0
        %1157 = vmatprep.subr.bf16.mxu0 0
        %1158 = vmatpush1.bf16.xpose.msra.mxu0 0
        %1159 = vmatprep.subr.bf16.mxu0 0
        %1160 = vmatpush1.bf16.xpose.msra.mxu0 0
        %1161 = vmatprep.subr.bf16.mxu0 0
        %1162 = vmatpush1.bf16.xpose.msra.mxu0 0
        %1163 = vmatprep.subr.bf16.mxu0 0
        %1164 = vmatpush1.bf16.xpose.msra.mxu0 0
        %1165 = vmatprep.subr.bf16.mxu0 0
        %1166 = vmatpush1.bf16.xpose.msra.mxu0 0
        %1167 = vmatprep.subr.bf16.mxu0 0
        %1168 = vmatpush1.bf16.xpose.msra.mxu0 0
        %1169 = vmatprep.subr.bf16.mxu0 0
        %1170 = vmatpush1.bf16.xpose.msra.mxu0 0
        %1171 = vmatprep.subr.bf16.mxu0 0
        %1172 = vmatpush1.bf16.xpose.msra.mxu0 0
        %1173 = vmatprep.subr.bf16.mxu0 0
        %1174 = vmatpush1.bf16.xpose.msra.mxu0 0
        %1175 = vmatprep.subr.bf16.mxu0 0
        %1176 = vmatpush1.bf16.xpose.msra.mxu0 0
        %1177 = vmatprep.subr.bf16.mxu0 0
        %1178 = vmatpush1.bf16.xpose.msra.mxu0 0
        %1179 = vmatprep.subr.bf16.mxu0 0
        %1180 = vmatpush1.bf16.xpose.msra.mxu0 0
        %1181 = vmatprep.subr.bf16.mxu0 0
        %1182 = vmatpush1.bf16.xpose.msra.mxu0 0
        %1183 = vmatprep.subr.bf16.mxu0 0
        %1184 = vmatpush1.bf16.xpose.msra.mxu0 0
        %1185 = vmatprep.mubr.bf16.mxu0 0
        %1186 = vmatmul.mubr.bf16.gmra.mrb[0].mxu0 %v1148
        %v1187 = vpop.f32.mrb[0].mxu0
        %v1188 = vadd.f32 0.0, %v1187
        %v1189 = vpop.f32.mrb[0].mxu0
        %v1190 = vpop.f32.mrb[0].mxu0
        %v1191 = vadd.f32 0.0, %v1190
        %v1192 = vpop.f32.mrb[0].mxu0
        %1193 = vdwg.mxu0
        %v1194 = vmul.f32 %v1188, 0.25
        %v1195 = vmul.f32 %v1191, 0.25
        %v1196 = vadd.f32 %v1194, %v946
        %v1197 = vadd.f32 %v1195, %v946
        %v1198 = vsel %vm892, %v1196, -inf
        %1199 = vmax.xlane.f32.xlu0 %v1198
        %v1200 = vpop.xlane.xlu0 %1199
        %v1201 = vsel %vm892, %v1197, -inf
        %1202 = vmax.xlane.f32.xlu0 %v1201
        %v1203 = vpop.xlane.xlu0 %1202
        %v1204 = vsub.f32 %v1196, %v1200
        %v1205 = vsub.f32 %v1197, %v1203
        %v1206 = vmul.f32 %v1204, 1.442695
        %v1207 = vpow.pop %v1206
        %v1208 = vmul.f32 %v1205, 1.442695
        %v1209 = vpow.pop %v1208
        %v1210 = vsel %vm892, %v1207, 0.0
        %1211 = vadd.xlane.f32.xlu0 %v1210
        %v1212 = vpop.xlane.xlu0 %1211
        %v1213 = vsel %vm892, %v1209, 0.0
        %1214 = vadd.xlane.f32.xlu0 %v1213
        %v1215 = vpop.xlane.xlu0 %1214
        %v1216 = vrcp.pop %v1212
        %v1217 = vrcp.pop %v1215
        %v1218 = vmul.f32 %v1207, %v1216
        %v1219 = vmul.f32 %v1209, %v1217
        %v1220 = vpack.c.bf16 %v1219, %v1218
        %1221 = vrot.lane.b32.xlu0 %v888, 96
        %v1222 = vpop.permute.xlu0 %1221
        %v1225 = vsel %vm892, %v1220, 0
        %1227 = vmatprep.subr.bf16.mxu0 0
        %1228 = vmatpush1.bf16.msra.mxu0 %v1222
        %1229 = vmatprep.subr.bf16.mxu0 0
        %1230 = vmatpush1.bf16.msra.mxu0 0
        %1231 = vmatprep.subr.bf16.mxu0 0
        %1232 = vmatpush1.bf16.msra.mxu0 0
        %1233 = vmatprep.subr.bf16.mxu0 0
        %1234 = vmatpush1.bf16.msra.mxu0 0
        %1235 = vmatprep.subr.bf16.mxu0 0
        %1236 = vmatpush1.bf16.msra.mxu0 0
        %1237 = vmatprep.subr.bf16.mxu0 0
        %1238 = vmatpush1.bf16.msra.mxu0 0
        %1239 = vmatprep.subr.bf16.mxu0 0
        %1240 = vmatpush1.bf16.msra.mxu0 0
        %1241 = vmatprep.subr.bf16.mxu0 0
        %1242 = vmatpush1.bf16.msra.mxu0 0
        %1243 = vmatprep.subr.bf16.mxu0 0
        %1244 = vmatpush1.bf16.msra.mxu0 0
        %1245 = vmatprep.subr.bf16.mxu0 0
        %1246 = vmatpush1.bf16.msra.mxu0 0
        %1247 = vmatprep.subr.bf16.mxu0 0
        %1248 = vmatpush1.bf16.msra.mxu0 0
        %1249 = vmatprep.subr.bf16.mxu0 0
        %1250 = vmatpush1.bf16.msra.mxu0 0
        %1251 = vmatprep.subr.bf16.mxu0 0
        %1252 = vmatpush1.bf16.msra.mxu0 0
        %1253 = vmatprep.subr.bf16.mxu0 0
        %1254 = vmatpush1.bf16.msra.mxu0 0
        %1255 = vmatprep.subr.bf16.mxu0 0
        %1256 = vmatpush1.bf16.msra.mxu0 0
        %1257 = vmatprep.subr.bf16.mxu0 0
        %1258 = vmatpush1.bf16.msra.mxu0 0
        %1259 = vmatprep.mubr.bf16.mxu0 0
        %1260 = vmatmul.mubr.bf16.gmra.mrb[0].mxu0 %v1225
        %v1261 = vpop.f32.mrb[0].mxu0
        %v1262 = vadd.f32 0.0, %v1261
        %v1263 = vpop.f32.mrb[0].mxu0
        %v1264 = vpop.f32.mrb[0].mxu0
        %v1265 = vadd.f32 0.0, %v1264
        %v1266 = vpop.f32.mrb[0].mxu0
        %1267 = vdwg.mxu0
        %1268 = vrot.lane.b32.xlu0 %v887, 80
        %v1269 = vpop.permute.xlu0 %1268
        %1270 = vrot.lane.b32.xlu0 %v887, 16
        %v1271 = vpop.permute.xlu0 %1270
        %v1273 = vsel %vm892, %v1269, 0
        %v1276 = vsel %vm892, %v1271, 0
        %1278 = vmatprep.subr.bf16.mxu0 0
        %1279 = vmatpush1.bf16.xpose.msra.mxu0 %v1276
        %1280 = vmatprep.subr.bf16.mxu0 0
        %1281 = vmatpush1.bf16.xpose.msra.mxu0 0
        %1282 = vmatprep.subr.bf16.mxu0 0
        %1283 = vmatpush1.bf16.xpose.msra.mxu0 0
        %1284 = vmatprep.subr.bf16.mxu0 0
        %1285 = vmatpush1.bf16.xpose.msra.mxu0 0
        %1286 = vmatprep.subr.bf16.mxu0 0
        %1287 = vmatpush1.bf16.xpose.msra.mxu0 0
        %1288 = vmatprep.subr.bf16.mxu0 0
        %1289 = vmatpush1.bf16.xpose.msra.mxu0 0
        %1290 = vmatprep.subr.bf16.mxu0 0
        %1291 = vmatpush1.bf16.xpose.msra.mxu0 0
        %1292 = vmatprep.subr.bf16.mxu0 0
        %1293 = vmatpush1.bf16.xpose.msra.mxu0 0
        %1294 = vmatprep.subr.bf16.mxu0 0
        %1295 = vmatpush1.bf16.xpose.msra.mxu0 0
        %1296 = vmatprep.subr.bf16.mxu0 0
        %1297 = vmatpush1.bf16.xpose.msra.mxu0 0
        %1298 = vmatprep.subr.bf16.mxu0 0
        %1299 = vmatpush1.bf16.xpose.msra.mxu0 0
        %1300 = vmatprep.subr.bf16.mxu0 0
        %1301 = vmatpush1.bf16.xpose.msra.mxu0 0
        %1302 = vmatprep.subr.bf16.mxu0 0
        %1303 = vmatpush1.bf16.xpose.msra.mxu0 0
        %1304 = vmatprep.subr.bf16.mxu0 0
        %1305 = vmatpush1.bf16.xpose.msra.mxu0 0
        %1306 = vmatprep.subr.bf16.mxu0 0
        %1307 = vmatpush1.bf16.xpose.msra.mxu0 0
        %1308 = vmatprep.subr.bf16.mxu0 0
        %1309 = vmatpush1.bf16.xpose.msra.mxu0 0
        %1310 = vmatprep.mubr.bf16.mxu0 0
        %1311 = vmatmul.mubr.bf16.gmra.mrb[0].mxu0 %v1273
        %v1312 = vpop.f32.mrb[0].mxu0
        %v1313 = vadd.f32 0.0, %v1312
        %v1314 = vpop.f32.mrb[0].mxu0
        %v1315 = vpop.f32.mrb[0].mxu0
        %v1316 = vadd.f32 0.0, %v1315
        %v1317 = vpop.f32.mrb[0].mxu0
        %1318 = vdwg.mxu0
        %v1319 = vmul.f32 %v1313, 0.25
        %v1320 = vmul.f32 %v1316, 0.25
        %v1321 = vadd.f32 %v1319, %v946
        %v1322 = vadd.f32 %v1320, %v946
        %v1323 = vsel %vm892, %v1321, -inf
        %1324 = vmax.xlane.f32.xlu0 %v1323
        %v1325 = vpop.xlane.xlu0 %1324
        %v1326 = vsel %vm892, %v1322, -inf
        %1327 = vmax.xlane.f32.xlu0 %v1326
        %v1328 = vpop.xlane.xlu0 %1327
        %v1329 = vsub.f32 %v1321, %v1325
        %v1330 = vsub.f32 %v1322, %v1328
        %v1331 = vmul.f32 %v1329, 1.442695
        %v1332 = vpow.pop %v1331
        %v1333 = vmul.f32 %v1330, 1.442695
        %v1334 = vpow.pop %v1333
        %v1335 = vsel %vm892, %v1332, 0.0
        %1336 = vadd.xlane.f32.xlu0 %v1335
        %v1337 = vpop.xlane.xlu0 %1336
        %v1338 = vsel %vm892, %v1334, 0.0
        %1339 = vadd.xlane.f32.xlu0 %v1338
        %v1340 = vpop.xlane.xlu0 %1339
        %v1341 = vrcp.pop %v1337
        %v1342 = vrcp.pop %v1340
        %v1343 = vmul.f32 %v1332, %v1341
        %v1344 = vmul.f32 %v1334, %v1342
        %v1345 = vpack.c.bf16 %v1344, %v1343
        %1346 = vrot.lane.b32.xlu0 %v888, 80
        %v1347 = vpop.permute.xlu0 %1346
        %v1350 = vsel %vm892, %v1345, 0
        %1352 = vmatprep.subr.bf16.mxu0 0
        %1353 = vmatpush1.bf16.msra.mxu0 %v1347
        %1354 = vmatprep.subr.bf16.mxu0 0
        %1355 = vmatpush1.bf16.msra.mxu0 0
        %1356 = vmatprep.subr.bf16.mxu0 0
        %1357 = vmatpush1.bf16.msra.mxu0 0
        %1358 = vmatprep.subr.bf16.mxu0 0
        %1359 = vmatpush1.bf16.msra.mxu0 0
        %1360 = vmatprep.subr.bf16.mxu0 0
        %1361 = vmatpush1.bf16.msra.mxu0 0
        %1362 = vmatprep.subr.bf16.mxu0 0
        %1363 = vmatpush1.bf16.msra.mxu0 0
        %1364 = vmatprep.subr.bf16.mxu0 0
        %1365 = vmatpush1.bf16.msra.mxu0 0
        %1366 = vmatprep.subr.bf16.mxu0 0
        %1367 = vmatpush1.bf16.msra.mxu0 0
        %1368 = vmatprep.subr.bf16.mxu0 0
        %1369 = vmatpush1.bf16.msra.mxu0 0
        %1370 = vmatprep.subr.bf16.mxu0 0
        %1371 = vmatpush1.bf16.msra.mxu0 0
        %1372 = vmatprep.subr.bf16.mxu0 0
        %1373 = vmatpush1.bf16.msra.mxu0 0
        %1374 = vmatprep.subr.bf16.mxu0 0
        %1375 = vmatpush1.bf16.msra.mxu0 0
        %1376 = vmatprep.subr.bf16.mxu0 0
        %1377 = vmatpush1.bf16.msra.mxu0 0
        %1378 = vmatprep.subr.bf16.mxu0 0
        %1379 = vmatpush1.bf16.msra.mxu0 0
        %1380 = vmatprep.subr.bf16.mxu0 0
        %1381 = vmatpush1.bf16.msra.mxu0 0
        %1382 = vmatprep.subr.bf16.mxu0 0
        %1383 = vmatpush1.bf16.msra.mxu0 0
        %1384 = vmatprep.mubr.bf16.mxu0 0
        %1385 = vmatmul.mubr.bf16.gmra.mrb[0].mxu0 %v1350
        %v1386 = vpop.f32.mrb[0].mxu0
        %v1387 = vadd.f32 0.0, %v1386
        %v1388 = vpop.f32.mrb[0].mxu0
        %v1389 = vpop.f32.mrb[0].mxu0
        %v1390 = vadd.f32 0.0, %v1389
        %v1391 = vpop.f32.mrb[0].mxu0
        %1392 = vdwg.mxu0
        %1395 = vrot.lane.b32.xlu0 %v1137, 16
        %v1396 = vpop.permute.xlu0 %1395
        %1397 = vrot.lane.b32.xlu0 %v1140, 16
        %v1398 = vpop.permute.xlu0 %1397
        %1403 = vrot.lane.b32.xlu0 %v1262, 32
        %v1404 = vpop.permute.xlu0 %1403
        %1405 = vrot.lane.b32.xlu0 %v1265, 32
        %v1406 = vpop.permute.xlu0 %1405
        %1411 = vrot.lane.b32.xlu0 %v1387, 48
        %v1412 = vpop.permute.xlu0 %1411
        %1413 = vrot.lane.b32.xlu0 %v1390, 48
        %v1414 = vpop.permute.xlu0 %1413
        %v1417 = vsel %vm892, %v1011, %v1396
        %v1418 = vsel %vm892, %v1014, %v1398
        %vm1419 = vcmask 261120
        %v1420 = vsel %vm1419, %v1417, %v1404
        %v1421 = vsel %vm1419, %v1418, %v1406
        %vm1422 = vcmask 392192
        %v1423 = vsel %vm1422, %v1420, %v1412
        %v1424 = vsel %vm1422, %v1421, %v1414
        %v1425 = vpack.c.bf16 %v1424, %v1423
        %s1426 = smul.u32 %s40, 8
        %s1427 = smul.addr %s1426, 4
        %s1428 = scalar_lea.vmem %s7, %s1427
        %v1429 = vld [vmem:[%s1428] sm:$0xf]
        %v1430 = vld [vmem:[%s1428 + $0x4] sm:$0xf]
        %v1431 = vld [vmem:[%s1428 + $0x8] sm:$0xf]
        %v1432 = vld [vmem:[%s1428 + $0xc] sm:$0xf]
        %v1433 = vld [vmem:[%s1428 + $0x10] sm:$0xf]
        %v1434 = vld [vmem:[%s1428 + $0x14] sm:$0xf]
        %v1435 = vld [vmem:[%s1428 + $0x18] sm:$0xf]
        %v1436 = vld [vmem:[%s1428 + $0x1c] sm:$0xf]
        %s1437 = scalar_lea.vmem %s8, %s40
        %v1438 = vld [vmem:[%s1437] sm:$0x1]
        %v1440 = vlaneseq
        %v1441 = vshrl.u32 %v1440, 7
        %v1442 = vsub.s32 0, %v1441
        %v1443 = vrot.slane %v1438, %v1442
        %v1453 = vunpack.c.l.b16 %v1429
        %v1454 = vunpack.c.l.b16 %v1430
        %v1455 = vunpack.c.l.b16 %v1431
        %v1456 = vunpack.c.l.b16 %v1432
        %v1457 = vunpack.c.l.b16 %v1433
        %v1458 = vunpack.c.l.b16 %v1434
        %v1459 = vunpack.c.l.b16 %v1435
        %v1460 = vunpack.c.l.b16 %v1436
        %v1461 = vpack.c.b16 %v1454, %v1453
        %v1462 = vpack.c.b16 %v1456, %v1455
        %v1463 = vpack.c.b16 %v1458, %v1457
        %v1464 = vpack.c.b16 %v1460, %v1459
        %v1470 = vsel %vm837, %v1425, 0
        %1472 = vmatprep.subr.bf16.mxu0 0
        %1473 = vmatpush1.bf16.msra.mxu0 %v1461
        %1474 = vmatprep.subr.bf16.mxu0 0
        %1475 = vmatpush1.bf16.msra.mxu0 %v1462
        %1476 = vmatprep.subr.bf16.mxu0 0
        %1477 = vmatpush1.bf16.msra.mxu0 %v1463
        %1478 = vmatprep.subr.bf16.mxu0 0
        %1479 = vmatpush1.bf16.msra.mxu0 %v1464
        %1480 = vmatprep.subr.bf16.mxu0 0
        %1481 = vmatpush1.bf16.msra.mxu0 0
        %1482 = vmatprep.subr.bf16.mxu0 0
        %1483 = vmatpush1.bf16.msra.mxu0 0
        %1484 = vmatprep.subr.bf16.mxu0 0
        %1485 = vmatpush1.bf16.msra.mxu0 0
        %1486 = vmatprep.subr.bf16.mxu0 0
        %1487 = vmatpush1.bf16.msra.mxu0 0
        %1488 = vmatprep.subr.bf16.mxu0 0
        %1489 = vmatpush1.bf16.msra.mxu0 0
        %1490 = vmatprep.subr.bf16.mxu0 0
        %1491 = vmatpush1.bf16.msra.mxu0 0
        %1492 = vmatprep.subr.bf16.mxu0 0
        %1493 = vmatpush1.bf16.msra.mxu0 0
        %1494 = vmatprep.subr.bf16.mxu0 0
        %1495 = vmatpush1.bf16.msra.mxu0 0
        %1496 = vmatprep.subr.bf16.mxu0 0
        %1497 = vmatpush1.bf16.msra.mxu0 0
        %1498 = vmatprep.subr.bf16.mxu0 0
        %1499 = vmatpush1.bf16.msra.mxu0 0
        %1500 = vmatprep.subr.bf16.mxu0 0
        %1501 = vmatpush1.bf16.msra.mxu0 0
        %1502 = vmatprep.subr.bf16.mxu0 0
        %1503 = vmatpush1.bf16.msra.mxu0 0
        %1504 = vmatprep.mubr.bf16.mxu0 0
        %1505 = vmatmul.mubr.bf16.gmra.mrb[0].mxu0 %v1470
        %v1506 = vpop.f32.mrb[0].mxu0
        %v1507 = vadd.f32 %v1443, %v1506
        %v1508 = vpop.f32.mrb[0].mxu0
        %v1509 = vpop.f32.mrb[0].mxu0
        %v1510 = vadd.f32 %v1443, %v1509
        %v1511 = vpop.f32.mrb[0].mxu0
        %1512 = vdwg.mxu0
        %v1513 = vadd.f32 %v1507, %v769
        %v1514 = vadd.f32 %v1510, %v770
        %s1515 = scalar_lea.vmem %s9, %s40
        %v1516 = vld [vmem:[%s1515] sm:$0x1]
        %s1517 = scalar_lea.vmem %s10, %s40
        %v1518 = vld [vmem:[%s1517] sm:$0x1]
        %v1519 = vsel %vm837, %v1513, 0.0
        %1520 = vadd.xlane.f32.xlu0 %v1519
        %v1521 = vpop.xlane.xlu0 %1520
        %v1522 = vsel %vm837, %v1514, 0.0
        %1523 = vadd.xlane.f32.xlu0 %v1522
        %v1524 = vpop.xlane.xlu0 %1523
        %v1525 = vrcp.pop 64.0
        %v1526 = vmul.f32 %v1521, %v1525
        %v1527 = vmul.f32 %v1524, %v1525
        %v1528 = vsub.f32 %v1513, %v1526
        %v1529 = vsub.f32 %v1514, %v1527
        %v1530 = vmul.f32 %v1528, %v1528
        %v1531 = vmul.f32 %v1529, %v1529
        %v1532 = vsel %vm837, %v1530, 0.0
        %1533 = vadd.xlane.f32.xlu0 %v1532
        %v1534 = vpop.xlane.xlu0 %1533
        %v1535 = vsel %vm837, %v1531, 0.0
        %1536 = vadd.xlane.f32.xlu0 %v1535
        %v1537 = vpop.xlane.xlu0 %1536
        %v1538 = vmul.f32 %v1534, %v1525
        %v1539 = vmul.f32 %v1537, %v1525
        %v1540 = vadd.f32 %v1538, 1e-07
        %v1541 = vadd.f32 %v1539, 1e-07
        %v1542 = vrsqrt.pop %v1540
        %v1543 = vrsqrt.pop %v1541
        %v1544 = vmul.f32 %v1528, %v1542
        %v1545 = vmul.f32 %v1529, %v1543
        %v1547 = vlaneseq
        %v1548 = vshrl.u32 %v1547, 7
        %v1549 = vsub.s32 0, %v1548
        %v1550 = vrot.slane %v1516, %v1549
        %v1552 = vmul.f32 %v1544, %v1550
        %v1553 = vmul.f32 %v1545, %v1550
        %v1555 = vlaneseq
        %v1556 = vshrl.u32 %v1555, 7
        %v1557 = vsub.s32 0, %v1556
        %v1558 = vrot.slane %v1518, %v1557
        %v1560 = vadd.f32 %v1552, %v1558
        %v1561 = vadd.f32 %v1553, %v1558
        %v1562 = vpack.c.bf16 %v1561, %v1560
        %s1563 = smul.addr %s1426, 4
        %s1564 = scalar_lea.vmem %s11, %s1563
        %v1565 = vld [vmem:[%s1564] sm:$0xf]
        %v1566 = vld [vmem:[%s1564 + $0x4] sm:$0xf]
        %v1567 = vld [vmem:[%s1564 + $0x8] sm:$0xf]
        %v1568 = vld [vmem:[%s1564 + $0xc] sm:$0xf]
        %v1569 = vld [vmem:[%s1564 + $0x10] sm:$0xf]
        %v1570 = vld [vmem:[%s1564 + $0x14] sm:$0xf]
        %v1571 = vld [vmem:[%s1564 + $0x18] sm:$0xf]
        %v1572 = vld [vmem:[%s1564 + $0x1c] sm:$0xf]
        %s1573 = scalar_lea.vmem %s12, %s40
        %v1574 = vld [vmem:[%s1573] sm:$0x1]
        %v1576 = vlaneseq
        %v1577 = vshrl.u32 %v1576, 7
        %v1578 = vsub.s32 0, %v1577
        %v1579 = vrot.slane %v1574, %v1578
        %v1589 = vunpack.c.l.b16 %v1565
        %v1590 = vunpack.c.l.b16 %v1566
        %v1591 = vunpack.c.l.b16 %v1567
        %v1592 = vunpack.c.l.b16 %v1568
        %v1593 = vunpack.c.l.b16 %v1569
        %v1594 = vunpack.c.l.b16 %v1570
        %v1595 = vunpack.c.l.b16 %v1571
        %v1596 = vunpack.c.l.b16 %v1572
        %v1597 = vpack.c.b16 %v1590, %v1589
        %v1598 = vpack.c.b16 %v1592, %v1591
        %v1599 = vpack.c.b16 %v1594, %v1593
        %v1600 = vpack.c.b16 %v1596, %v1595
        %v1606 = vsel %vm837, %v1562, 0
        %1608 = vmatprep.subr.bf16.mxu0 0
        %1609 = vmatpush1.bf16.msra.mxu0 %v1597
        %1610 = vmatprep.subr.bf16.mxu0 0
        %1611 = vmatpush1.bf16.msra.mxu0 %v1598
        %1612 = vmatprep.subr.bf16.mxu0 0
        %1613 = vmatpush1.bf16.msra.mxu0 %v1599
        %1614 = vmatprep.subr.bf16.mxu0 0
        %1615 = vmatpush1.bf16.msra.mxu0 %v1600
        %1616 = vmatprep.subr.bf16.mxu0 0
        %1617 = vmatpush1.bf16.msra.mxu0 0
        %1618 = vmatprep.subr.bf16.mxu0 0
        %1619 = vmatpush1.bf16.msra.mxu0 0
        %1620 = vmatprep.subr.bf16.mxu0 0
        %1621 = vmatpush1.bf16.msra.mxu0 0
        %1622 = vmatprep.subr.bf16.mxu0 0
        %1623 = vmatpush1.bf16.msra.mxu0 0
        %1624 = vmatprep.subr.bf16.mxu0 0
        %1625 = vmatpush1.bf16.msra.mxu0 0
        %1626 = vmatprep.subr.bf16.mxu0 0
        %1627 = vmatpush1.bf16.msra.mxu0 0
        %1628 = vmatprep.subr.bf16.mxu0 0
        %1629 = vmatpush1.bf16.msra.mxu0 0
        %1630 = vmatprep.subr.bf16.mxu0 0
        %1631 = vmatpush1.bf16.msra.mxu0 0
        %1632 = vmatprep.subr.bf16.mxu0 0
        %1633 = vmatpush1.bf16.msra.mxu0 0
        %1634 = vmatprep.subr.bf16.mxu0 0
        %1635 = vmatpush1.bf16.msra.mxu0 0
        %1636 = vmatprep.subr.bf16.mxu0 0
        %1637 = vmatpush1.bf16.msra.mxu0 0
        %1638 = vmatprep.subr.bf16.mxu0 0
        %1639 = vmatpush1.bf16.msra.mxu0 0
        %1640 = vmatprep.mubr.bf16.mxu0 0
        %1641 = vmatmul.mubr.bf16.gmra.mrb[0].mxu0 %v1606
        %v1642 = vpop.f32.mrb[0].mxu0
        %v1643 = vadd.f32 %v1579, %v1642
        %v1644 = vpop.f32.mrb[0].mxu0
        %v1645 = vpop.f32.mrb[0].mxu0
        %v1646 = vadd.f32 %v1579, %v1645
        %v1647 = vpop.f32.mrb[0].mxu0
        %1648 = vdwg.mxu0
        %v1649 = vmul.f32 %v1643, %v1643
        %v1650 = vmul.f32 %v1646, %v1646
        %v1651 = vmul.f32 %v1643, %v1649
        %v1652 = vmul.f32 %v1646, %v1650
        %v1653 = vmul.f32 %v1651, 0.044715
        %v1654 = vmul.f32 %v1652, 0.044715
        %v1655 = vadd.f32 %v1643, %v1653
        %v1656 = vadd.f32 %v1646, %v1654
        %v1657 = vmul.f32 %v1655, 0.7978846
        %v1658 = vmul.f32 %v1656, 0.7978846
        %v1659 = vtanh.pop %v1657
        %v1660 = vtanh.pop %v1658
        %v1661 = vadd.f32 %v1659, 1.0
        %v1662 = vadd.f32 %v1660, 1.0
        %v1663 = vmul.f32 %v1661, 0.5
        %v1664 = vmul.f32 %v1662, 0.5
        %v1665 = vmul.f32 %v1643, %v1663
        %v1666 = vmul.f32 %v1646, %v1664
        %v1667 = vpack.c.bf16 %v1666, %v1665
        %s1668 = smul.addr %s772, 4
        %s1669 = scalar_lea.vmem %s13, %s1668
        %v1670 = vld [vmem:[%s1669] sm:$0xf]
        %v1671 = vld [vmem:[%s1669 + $0x4] sm:$0xf]
        %v1672 = vld [vmem:[%s1669 + $0x8] sm:$0xf]
        %v1673 = vld [vmem:[%s1669 + $0xc] sm:$0xf]
        %v1674 = vld [vmem:[%s1669 + $0x10] sm:$0xf]
        %v1675 = vld [vmem:[%s1669 + $0x14] sm:$0xf]
        %v1676 = vld [vmem:[%s1669 + $0x18] sm:$0xf]
        %v1677 = vld [vmem:[%s1669 + $0x1c] sm:$0xf]
        %v1678 = vld [vmem:[%s1669 + $0x20] sm:$0xf]
        %v1679 = vld [vmem:[%s1669 + $0x24] sm:$0xf]
        %v1680 = vld [vmem:[%s1669 + $0x28] sm:$0xf]
        %v1681 = vld [vmem:[%s1669 + $0x2c] sm:$0xf]
        %v1682 = vld [vmem:[%s1669 + $0x30] sm:$0xf]
        %v1683 = vld [vmem:[%s1669 + $0x34] sm:$0xf]
        %v1684 = vld [vmem:[%s1669 + $0x38] sm:$0xf]
        %v1685 = vld [vmem:[%s1669 + $0x3c] sm:$0xf]
        %s1686 = scalar_lea.vmem %s14, %s40
        %v1687 = vld [vmem:[%s1686] sm:$0x1]
        %v1689 = vlaneseq
        %v1690 = vshrl.u32 %v1689, 7
        %v1691 = vsub.s32 0, %v1690
        %v1692 = vrot.slane %v1687, %v1691
        %v1710 = vunpack.c.l.b16 %v1670
        %v1711 = vunpack.c.l.b16 %v1671
        %v1712 = vunpack.c.l.b16 %v1672
        %v1713 = vunpack.c.l.b16 %v1673
        %v1714 = vunpack.c.l.b16 %v1674
        %v1715 = vunpack.c.l.b16 %v1675
        %v1716 = vunpack.c.l.b16 %v1676
        %v1717 = vunpack.c.l.b16 %v1677
        %v1718 = vunpack.c.l.b16 %v1678
        %v1719 = vunpack.c.l.b16 %v1679
        %v1720 = vunpack.c.l.b16 %v1680
        %v1721 = vunpack.c.l.b16 %v1681
        %v1722 = vunpack.c.l.b16 %v1682
        %v1723 = vunpack.c.l.b16 %v1683
        %v1724 = vunpack.c.l.b16 %v1684
        %v1725 = vunpack.c.l.b16 %v1685
        %v1726 = vpack.c.b16 %v1711, %v1710
        %v1727 = vpack.c.b16 %v1713, %v1712
        %v1728 = vpack.c.b16 %v1715, %v1714
        %v1729 = vpack.c.b16 %v1717, %v1716
        %v1730 = vpack.c.b16 %v1719, %v1718
        %v1731 = vpack.c.b16 %v1721, %v1720
        %v1732 = vpack.c.b16 %v1723, %v1722
        %v1733 = vpack.c.b16 %v1725, %v1724
        %1742 = vmatprep.subr.bf16.mxu0 0
        %1743 = vmatpush1.bf16.msra.mxu0 %v1726
        %1744 = vmatprep.subr.bf16.mxu0 0
        %1745 = vmatpush1.bf16.msra.mxu0 %v1727
        %1746 = vmatprep.subr.bf16.mxu0 0
        %1747 = vmatpush1.bf16.msra.mxu0 %v1728
        %1748 = vmatprep.subr.bf16.mxu0 0
        %1749 = vmatpush1.bf16.msra.mxu0 %v1729
        %1750 = vmatprep.subr.bf16.mxu0 0
        %1751 = vmatpush1.bf16.msra.mxu0 %v1730
        %1752 = vmatprep.subr.bf16.mxu0 0
        %1753 = vmatpush1.bf16.msra.mxu0 %v1731
        %1754 = vmatprep.subr.bf16.mxu0 0
        %1755 = vmatpush1.bf16.msra.mxu0 %v1732
        %1756 = vmatprep.subr.bf16.mxu0 0
        %1757 = vmatpush1.bf16.msra.mxu0 %v1733
        %1758 = vmatprep.subr.bf16.mxu0 0
        %1759 = vmatpush1.bf16.msra.mxu0 0
        %1760 = vmatprep.subr.bf16.mxu0 0
        %1761 = vmatpush1.bf16.msra.mxu0 0
        %1762 = vmatprep.subr.bf16.mxu0 0
        %1763 = vmatpush1.bf16.msra.mxu0 0
        %1764 = vmatprep.subr.bf16.mxu0 0
        %1765 = vmatpush1.bf16.msra.mxu0 0
        %1766 = vmatprep.subr.bf16.mxu0 0
        %1767 = vmatpush1.bf16.msra.mxu0 0
        %1768 = vmatprep.subr.bf16.mxu0 0
        %1769 = vmatpush1.bf16.msra.mxu0 0
        %1770 = vmatprep.subr.bf16.mxu0 0
        %1771 = vmatpush1.bf16.msra.mxu0 0
        %1772 = vmatprep.subr.bf16.mxu0 0
        %1773 = vmatpush1.bf16.msra.mxu0 0
        %1774 = vmatprep.mubr.bf16.mxu0 0
        %1775 = vmatmul.mubr.bf16.gmra.mrb[0].mxu0 %v1667
        %v1776 = vpop.f32.mrb[0].mxu0
        %v1777 = vadd.f32 %v1692, %v1776
        %v1778 = vpop.f32.mrb[0].mxu0
        %v1779 = vpop.f32.mrb[0].mxu0
        %v1780 = vadd.f32 %v1692, %v1779
        %v1781 = vpop.f32.mrb[0].mxu0
        %1782 = vdwg.mxu0
        %v1783 = vadd.f32 %v1777, %v1560
        %v1784 = vadd.f32 %v1780, %v1561
        %s1785 = scalar_lea.vmem %s15, %s40
        %v1786 = vld [vmem:[%s1785] sm:$0x1]
        %s1787 = scalar_lea.vmem %s16, %s40
        %v1788 = vld [vmem:[%s1787] sm:$0x1]
        %v1789 = vsel %vm837, %v1783, 0.0
        %1790 = vadd.xlane.f32.xlu0 %v1789
        %v1791 = vpop.xlane.xlu0 %1790
        %v1792 = vsel %vm837, %v1784, 0.0
        %1793 = vadd.xlane.f32.xlu0 %v1792
        %v1794 = vpop.xlane.xlu0 %1793
        %v1795 = vmul.f32 %v1791, %v1525
        %v1796 = vmul.f32 %v1794, %v1525
        %v1797 = vsub.f32 %v1783, %v1795
        %v1798 = vsub.f32 %v1784, %v1796
        %v1799 = vmul.f32 %v1797, %v1797
        %v1800 = vmul.f32 %v1798, %v1798
        %v1801 = vsel %vm837, %v1799, 0.0
        %1802 = vadd.xlane.f32.xlu0 %v1801
        %v1803 = vpop.xlane.xlu0 %1802
        %v1804 = vsel %vm837, %v1800, 0.0
        %1805 = vadd.xlane.f32.xlu0 %v1804
        %v1806 = vpop.xlane.xlu0 %1805
        %v1807 = vmul.f32 %v1803, %v1525
        %v1808 = vmul.f32 %v1806, %v1525
        %v1809 = vadd.f32 %v1807, 1e-07
        %v1810 = vadd.f32 %v1808, 1e-07
        %v1811 = vrsqrt.pop %v1809
        %v1812 = vrsqrt.pop %v1810
        %v1813 = vmul.f32 %v1797, %v1811
        %v1814 = vmul.f32 %v1798, %v1812
        %v1816 = vlaneseq
        %v1817 = vshrl.u32 %v1816, 7
        %v1818 = vsub.s32 0, %v1817
        %v1819 = vrot.slane %v1786, %v1818
        %v1821 = vmul.f32 %v1813, %v1819
        %v1822 = vmul.f32 %v1814, %v1819
        %v1824 = vlaneseq
        %v1825 = vshrl.u32 %v1824, 7
        %v1826 = vsub.s32 0, %v1825
        %v1827 = vrot.slane %v1788, %v1826
        %v1829 = vadd.f32 %v1821, %v1827
        %v1830 = vadd.f32 %v1822, %v1827
        %1831 = vst.msk [vmem:[#allocation2] sm:$0xff] %vm837, %v1829
        %1832 = vst.msk [vmem:[#allocation2 + $0x8] sm:$0xff] %vm837, %v1830
        %p1833 = scmp.eq.s32.totalorder %s40, 1
        // Predicated region
        $region109: #{model_forward.1} parent=103 // pred_check
          %p1834 = pneg %p1833
        $region110: #{model_forward.1} parent=103 // pred_check_branch
          %1836 = sbr.rel (%p1834) target = $region112
        $region111: #{model_forward.1} parent=103 // pred_region
          %v1837 = vpack.c.bf16 %v1829, %v1829
          %v1838 = vld [vmem:[%s17] sm:$0xf]
          %v1839 = vld [vmem:[%s17 + $0x4] sm:$0xf]
          %v1840 = vld [vmem:[%s17 + $0x8] sm:$0xf]
          %v1841 = vld [vmem:[%s17 + $0xc] sm:$0xf]
          %v1842 = vld [vmem:[%s17 + $0x10] sm:$0xf]
          %v1843 = vld [vmem:[%s17 + $0x14] sm:$0xf]
          %v1844 = vld [vmem:[%s17 + $0x18] sm:$0xf]
          %v1845 = vld [vmem:[%s17 + $0x1c] sm:$0xf]
          %v1846 = vld [vmem:[%s18] sm:$0x1]
          %v1855 = vunpack.c.l.b16 %v1838
          %v1856 = vunpack.c.l.b16 %v1839
          %v1857 = vunpack.c.l.b16 %v1840
          %v1858 = vunpack.c.l.b16 %v1841
          %v1859 = vunpack.c.l.b16 %v1842
          %v1860 = vunpack.c.l.b16 %v1843
          %v1861 = vunpack.c.l.b16 %v1844
          %v1862 = vunpack.c.l.b16 %v1845
          %v1863 = vpack.c.b16 %v1856, %v1855
          %v1864 = vpack.c.b16 %v1858, %v1857
          %v1865 = vpack.c.b16 %v1860, %v1859
          %v1866 = vpack.c.b16 %v1862, %v1861
          %v1872 = vsel %vm837, %v1837, 0
          %1874 = vmatprep.subr.bf16.mxu0 0
          %1875 = vmatpush1.bf16.msra.mxu0 %v1863
          %1876 = vmatprep.subr.bf16.mxu0 0
          %1877 = vmatpush1.bf16.msra.mxu0 %v1864
          %1878 = vmatprep.subr.bf16.mxu0 0
          %1879 = vmatpush1.bf16.msra.mxu0 %v1865
          %1880 = vmatprep.subr.bf16.mxu0 0
          %1881 = vmatpush1.bf16.msra.mxu0 %v1866
          %1882 = vmatprep.subr.bf16.mxu0 0
          %1883 = vmatpush1.bf16.msra.mxu0 0
          %1884 = vmatprep.subr.bf16.mxu0 0
          %1885 = vmatpush1.bf16.msra.mxu0 0
          %1886 = vmatprep.subr.bf16.mxu0 0
          %1887 = vmatpush1.bf16.msra.mxu0 0
          %1888 = vmatprep.subr.bf16.mxu0 0
          %1889 = vmatpush1.bf16.msra.mxu0 0
          %1890 = vmatprep.subr.bf16.mxu0 0
          %1891 = vmatpush1.bf16.msra.mxu0 0
          %1892 = vmatprep.subr.bf16.mxu0 0
          %1893 = vmatpush1.bf16.msra.mxu0 0
          %1894 = vmatprep.subr.bf16.mxu0 0
          %1895 = vmatpush1.bf16.msra.mxu0 0
          %1896 = vmatprep.subr.bf16.mxu0 0
          %1897 = vmatpush1.bf16.msra.mxu0 0
          %1898 = vmatprep.subr.bf16.mxu0 0
          %1899 = vmatpush1.bf16.msra.mxu0 0
          %1900 = vmatprep.subr.bf16.mxu0 0
          %1901 = vmatpush1.bf16.msra.mxu0 0
          %1902 = vmatprep.subr.bf16.mxu0 0
          %1903 = vmatpush1.bf16.msra.mxu0 0
          %1904 = vmatprep.subr.bf16.mxu0 0
          %1905 = vmatpush1.bf16.msra.mxu0 0
          %1906 = vmatprep.mubr.bf16.mxu0 0
          %1907 = vmatmul.mubr.bf16.gmra.mrb[0].mxu0 %v1872
          %v1908 = vpop.f32.mrb[0].mxu0
          %v1909 = vadd.f32 %v1846, %v1908
          %v1910 = vpop.f32.mrb[0].mxu0
          %v1911 = vpop.f32.mrb[0].mxu0
          %v1912 = vpop.f32.mrb[0].mxu0
          %1913 = vdwg.mxu0
          %v1914 = vmul.f32 %v1909, %v1909
          %v1915 = vmul.f32 %v1909, %v1914
          %v1916 = vmul.f32 %v1915, 0.044715
          %v1917 = vadd.f32 %v1909, %v1916
          %v1918 = vmul.f32 %v1917, 0.7978846
          %v1919 = vtanh.pop %v1918
          %v1920 = vadd.f32 %v1919, 1.0
          %v1921 = vmul.f32 %v1920, 0.5
          %v1922 = vmul.f32 %v1909, %v1921
          %v1923 = vpack.c.bf16 %v1922, %v1922
          %v1924 = vld [vmem:[%s19] sm:$0xf]
          %v1925 = vld [vmem:[%s19 + $0x4] sm:$0xf]
          %v1926 = vld [vmem:[%s19 + $0x8] sm:$0xf]
          %v1927 = vld [vmem:[%s19 + $0xc] sm:$0xf]
          %v1928 = vld [vmem:[%s19 + $0x10] sm:$0xf]
          %v1929 = vld [vmem:[%s19 + $0x14] sm:$0xf]
          %v1930 = vld [vmem:[%s19 + $0x18] sm:$0xf]
          %v1931 = vld [vmem:[%s19 + $0x1c] sm:$0xf]
          %v1932 = vld [vmem:[%s20] sm:$0x1]
          %v1941 = vunpack.c.l.b16 %v1924
          %v1942 = vunpack.c.l.b16 %v1925
          %v1943 = vunpack.c.l.b16 %v1926
          %v1944 = vunpack.c.l.b16 %v1927
          %v1945 = vunpack.c.l.b16 %v1928
          %v1946 = vunpack.c.l.b16 %v1929
          %v1947 = vunpack.c.l.b16 %v1930
          %v1948 = vunpack.c.l.b16 %v1931
          %v1949 = vpack.c.b16 %v1942, %v1941
          %v1950 = vpack.c.b16 %v1944, %v1943
          %v1951 = vpack.c.b16 %v1946, %v1945
          %v1952 = vpack.c.b16 %v1948, %v1947
          %v1958 = vsel %vm837, %v1923, 0
          %1960 = vmatprep.subr.bf16.mxu0 0
          %1961 = vmatpush1.bf16.msra.mxu0 %v1949
          %1962 = vmatprep.subr.bf16.mxu0 0
          %1963 = vmatpush1.bf16.msra.mxu0 %v1950
          %1964 = vmatprep.subr.bf16.mxu0 0
          %1965 = vmatpush1.bf16.msra.mxu0 %v1951
          %1966 = vmatprep.subr.bf16.mxu0 0
          %1967 = vmatpush1.bf16.msra.mxu0 %v1952
          %1968 = vmatprep.subr.bf16.mxu0 0
          %1969 = vmatpush1.bf16.msra.mxu0 0
          %1970 = vmatprep.subr.bf16.mxu0 0
          %1971 = vmatpush1.bf16.msra.mxu0 0
          %1972 = vmatprep.subr.bf16.mxu0 0
          %1973 = vmatpush1.bf16.msra.mxu0 0
          %1974 = vmatprep.subr.bf16.mxu0 0
          %1975 = vmatpush1.bf16.msra.mxu0 0
          %1976 = vmatprep.subr.bf16.mxu0 0
          %1977 = vmatpush1.bf16.msra.mxu0 0
          %1978 = vmatprep.subr.bf16.mxu0 0
          %1979 = vmatpush1.bf16.msra.mxu0 0
          %1980 = vmatprep.subr.bf16.mxu0 0
          %1981 = vmatpush1.bf16.msra.mxu0 0
          %1982 = vmatprep.subr.bf16.mxu0 0
          %1983 = vmatpush1.bf16.msra.mxu0 0
          %1984 = vmatprep.subr.bf16.mxu0 0
          %1985 = vmatpush1.bf16.msra.mxu0 0
          %1986 = vmatprep.subr.bf16.mxu0 0
          %1987 = vmatpush1.bf16.msra.mxu0 0
          %1988 = vmatprep.subr.bf16.mxu0 0
          %1989 = vmatpush1.bf16.msra.mxu0 0
          %1990 = vmatprep.subr.bf16.mxu0 0
          %1991 = vmatpush1.bf16.msra.mxu0 0
          %1992 = vmatprep.mubr.bf16.mxu0 0
          %1993 = vmatmul.mubr.bf16.gmra.mrb[0].mxu0 %v1958
          %v1994 = vpop.f32.mrb[0].mxu0
          %v1995 = vadd.f32 %v1932, %v1994
          %v1996 = vpop.f32.mrb[0].mxu0
          %v1997 = vpop.f32.mrb[0].mxu0
          %v1998 = vpop.f32.mrb[0].mxu0
          %1999 = vdwg.mxu0
          %2000 = vst [vmem:[%s686] sm:$0x1] %v1995
        $region112: #{model_forward.1} parent=103 // pred_fallthru
          _
        %s2001 = sand.u32 %s511, 1
        %s2002 = scalar_lea.sflag [#allocation4], %s2001
        %s2003 = sand.u32 %s511, 1
        %s2004 = scalar_lea.vmem [#allocation3], %s2003
        // Predicated region
        $region113: #{model_forward.1} parent=103 // pred_check
          %p2005 = pneg %p521
        $region114: #{model_forward.1} parent=103 // pred_check_branch
          %2007 = sbr.rel (%p2005) target = $region116
        $region115: #{model_forward.1} parent=103 // pred_region
          %s2009 = ssub.s32 16, 16
          %2010 = vsyncadd %s2002, %s2009
          %s2011 = smul.addr %s39, 16
          %s2012 = scalar_lea.hbm %s21, %s2011
          %s2014 = sshll.u32 %s2004, 4
          %s2015 = int_to_ptr.vmem [resolvable:$true] %s2014
          %2017 = dma.vmem_to_hbm [thread:$0]  %s2015, 16, %s2012, %s2002
        $region116: #{model_forward.1} parent=103 // pred_fallthru
          _
      $region104: #{model_forward.1} parent=5 // pred_fallthru
        _
      %p2018 = scmp.le.s32.totalorder 2, %s30
      // Predicated region
      $region117: #{model_forward.1} parent=5 // pred_check
        %p2019 = pneg %p2018
      $region118: #{model_forward.1} parent=5 // pred_check_branch
        %2021 = sbr.rel (%p2019) target = $region120
      $region119: #{model_forward.1} parent=5 // pred_region
        %s2022 = ssub.s32 %s30, 2
        // Predicated region
        $region121: #{model_forward.1} parent=119 // pred_check
          %p2023 = pneg %p527
        $region122: #{model_forward.1} parent=119 // pred_check_branch
          %2025 = sbr.rel (%p2023) target = $region124
        $region123: #{model_forward.1} parent=119 // pred_region
          %s2026 = sand.u32 %s512, 1
          %s2027 = scalar_lea.sflag [#allocation4], %s2026
          %s2028 = sand.u32 %s512, 1
          %s2029 = scalar_lea.vmem [#allocation3], %s2028
          %2030 = dma.done %s2027, 16
        $region124: #{model_forward.1} parent=119 // pred_fallthru
          _
      $region120: #{model_forward.1} parent=5 // pred_fallthru
        _
    $region6: #{model_forward.1} parent=1 // loop_footer
      %s34 = sadd.s32 1, %s30
    $region7: #{model_forward.1} parent=1 // loop_footer_branch
      %29 = sbr.rel target = $region3
    $region8: #{model_forward.1} parent=1 // loop_exit
      _
    %2031 = vsyncpa [#allocation4], 1
    %s2032 = scalar_lea.sflag [#allocation4], 1
    %2033 = vsyncpa %s2032, 1

</llo_original>
